<compile_context>
chip_gen: v5e
topology: v5e:2x2
jax: 0.10.0
libtpu: 0.0.40
codegen_flags: <defaults>
</compile_context>

<pallas_src>
import functools

import jax
import jax.numpy as jnp
import numpy as np
from jax import lax
from jax.experimental import pallas as pl
from jax.experimental.pallas import tpu as pltpu


def _fused_lstm_kernel(x_ref, h0_ref, c0_ref, wih_ref, whh_ref, b_ref,
                       y_ref, hn_ref, cn_ref,
                       seq_scr, gx_scr, h_scr, c_scr,
                       *, t_blk, hidden_dim, d_max, unroll):
    """All LSTM layers fused; grid = (layer, time_block), both sequential.

    x_ref  : (t_blk*B, d_max)  time-major 2-D slab of layer-0 inputs
    h0/c0  : (B, H)            initial state of the current layer
    wih    : (d_max, 4H)       fused input->gate weights (gates i,f,g,o on lanes)
    whh    : (H, 4H)           fused hidden->gate weights
    b      : (1, 4H)           combined bias (b_ih + b_hh)
    y_ref  : (t_blk*B, H)      per-step outputs (final layer wins in HBM)
    hn/cn  : (B, H)            final state of the current layer
    seq_scr: (T*B, d_max) f32  VMEM-resident inter-layer sequence
    gx_scr : (t_blk*B, 4H) f32 hoisted x-projection for the current block
    h_scr/c_scr: (B, H) f32    recurrent state (persists across time blocks)
    """
    H = hidden_dim
    B = h_scr.shape[0]
    l = pl.program_id(0)          # layer       (outer, sequential)
    tb = pl.program_id(1)         # time block  (inner, sequential)
    n_tb = pl.num_programs(1)

    @pl.when((l == 0) & (tb == 0))
    def _zero_seq():
        # Guarantees padding lanes (d_max > H) are zero and avoids reading
        # uninitialised VMEM through the layer-0 input select below.
        seq_scr[...] = jnp.zeros_like(seq_scr)

    @pl.when(tb == 0)
    def _init_state():
        h_scr[...] = h0_ref[...].astype(jnp.float32)
        c_scr[...] = c0_ref[...].astype(jnp.float32)

    # Weights stay resident in VMEM for the whole layer (constant index over tb).
    wih = wih_ref[...]                       # (d_max, 4H), possibly bf16
    whh = whh_ref[...]                       # (H,     4H)
    bias = b_ref[...].astype(jnp.float32)    # (1,     4H)
    mxu_dtype = whh.dtype

    row0 = pl.multiple_of(tb * (t_blk * B), t_blk * B)

    # ---- hoisted input projection: one dense MXU matmul per time block ----
    # Layer 0 reads the HBM X block; deeper layers read the previous layer's
    # output that is resident in VMEM scratch (no HBM round trip).
    x_blk = x_ref[...].astype(jnp.float32)                  # (t_blk*B, d_max)
    prev_blk = seq_scr[pl.ds(row0, t_blk * B)]              # (t_blk*B, d_max)
    xin = jnp.where(l == 0, x_blk, prev_blk).astype(mxu_dtype)
    gx_scr[...] = (jnp.dot(xin, wih, preferred_element_type=jnp.float32)
                   + bias)                                   # (t_blk*B, 4H)

    # ---- serial recurrence over the time block ----------------------------
    def step(i, carry):
        r = pl.multiple_of(i * B, B)
        g = gx_scr[pl.ds(r, B)] + jnp.dot(
            h_scr[...].astype(mxu_dtype), whh,
            preferred_element_type=jnp.float32)              # (B, 4H) f32
        # Two full-width EUP pushes (sigmoid + tanh over all 4H lanes) instead
        # of four sliced ones; gate order matches PyTorch (i, f, g, o).
        sg = jax.nn.sigmoid(g)
        tg = jnp.tanh(g)
        i_g = sg[:, 0 * H:1 * H]
        f_g = sg[:, 1 * H:2 * H]
        g_g = tg[:, 2 * H:3 * H]
        o_g = sg[:, 3 * H:4 * H]
        c_new = f_g * c_scr[...] + i_g * g_g
        h_new = o_g * jnp.tanh(c_new)
        c_scr[...] = c_new
        h_scr[...] = h_new
        tr = pl.multiple_of(row0 + i * B, B)
        if d_max == H:
            seq_scr[pl.ds(tr, B)] = h_new
        else:
            seq_scr[pl.ds(tr, B), pl.ds(0, H)] = h_new       # tail lanes stay 0
        return carry

    lax.fori_loop(0, t_blk, step, 0, unroll=unroll)

    # ---- block output writeback -------------------------------------------
    # Written for every layer; the output block for a given tb is written back
    # in grid order, so the last layer's values are what lands in HBM.
    out_blk = seq_scr[pl.ds(row0, t_blk * B)]
    if d_max != H:
        out_blk = out_blk[:, :H]
    y_ref[...] = out_blk.astype(y_ref.dtype)

    @pl.when(tb == n_tb - 1)
    def _write_final_state():
        hn_ref[...] = h_scr[...].astype(hn_ref.dtype)
        cn_ref[...] = c_scr[...].astype(cn_ref.dtype)


def _pick_time_block(T, B, *, max_steps=64, max_rows=4096):
    """Largest divisor of T whose (t_blk*B, d) block satisfies the (8,128)
    sublane rule (t_blk*B % 8 == 0 or the block covers the full sequence)."""
    best = None
    for cand in range(1, T + 1):
        if T % cand:
            continue
        if (cand * B) % 8 != 0 and cand != T:
            continue
        if cand <= max_steps and cand * B <= max_rows:
            best = cand
    if best is None:
        best = T       # full-sequence block always satisfies the layout rule
    return best


def _vmem_budget_bytes(T, t_blk, B, d_max, H, x_bytes, w_bytes):
    rows_blk = t_blk * B
    blocks = 2 * (rows_blk * d_max * x_bytes        # x block (double-buffered)
                  + rows_blk * H * 4                # y block
                  + 4 * B * H * 4                   # h0/c0/hn/cn blocks
                  + (d_max + H) * 4 * H * w_bytes   # wih + whh
                  + 4 * H * 4)                      # bias
    scratch = (T * B * d_max * 4                    # resident inter-layer seq
               + rows_blk * 4 * H * 4               # hoisted gate projection
               + 2 * B * H * 4)                     # h / c state
    est = blocks + scratch
    # Modest request (2x estimate), no 32 MiB floor; capped under v7x's 64 MiB.
    return int(min(48 * 1024 * 1024, max(8 * 1024 * 1024, 2 * est)))


def s2s2s_decoder_forward(X, hidden, cell, params, *, mxu_dtype=None):
    """Pallas implementation of S2S2SDecoder.forward (eval mode).

    X      : (B, T, inp_dim)   batch_first input
    hidden : (n_layers, B, H)
    cell   : (n_layers, B, H)
    params : list of (wih (Din,4H), whh (H,4H), b (1,4H)) per layer, gates i,f,g,o
    mxu_dtype: optional dtype (e.g. jnp.bfloat16) for MXU operands / weights.
    returns (output (B, T, H), hidden (n_layers, B, H), cell (n_layers, B, H))
    """
    B, T, inp_dim = X.shape
    n_layers, _, H = hidden.shape
    d_max = max(inp_dim, H)
    w_dtype = jnp.float32 if mxu_dtype is None else mxu_dtype

    # Pad layer-0 features to d_max so every layer shares one fused
    # (d_max, 4H) input-projection slab; zero rows/features contribute nothing.
    if inp_dim < d_max:
        X = jnp.pad(X, ((0, 0), (0, 0), (0, d_max - inp_dim)))
    # Time-major, flattened to a lane/sublane-dense 2-D slab (T*B, d_max).
    # (Single wrapper relayout per forward call, not per layer.)
    x2d = jnp.transpose(X, (1, 0, 2)).reshape(T * B, d_max)

    wih_all = jnp.stack(
        [jnp.pad(w, ((0, d_max - w.shape[0]), (0, 0))) for (w, _, _) in params]
    ).astype(w_dtype)                                              # (L, d_max, 4H)
    whh_all = jnp.stack([w for (_, w, _) in params]).astype(w_dtype)  # (L, H, 4H)
    b_all = jnp.stack([b for (_, _, b) in params])                    # (L, 1, 4H)

    t_blk = _pick_time_block(T, B)
    n_tb = T // t_blk
    unroll = min(8, t_blk)
    kernel = functools.partial(_fused_lstm_kernel, t_blk=t_blk, hidden_dim=H,
                               d_max=d_max, unroll=unroll)

    x_bytes = jnp.dtype(x2d.dtype).itemsize
    w_bytes = jnp.dtype(w_dtype).itemsize

    # Layer 0 reads time block tb of X; deeper layers pin block 0 (their input
    # comes from the VMEM-resident sequence scratch), so X is not re-fetched.
    def x_index(l, tb):
        return (tb * (1 - jnp.minimum(l, 1)), 0)

    y2d, h_n, c_n = pl.pallas_call(
        kernel,
        out_shape=(jax.ShapeDtypeStruct((T * B, H), X.dtype),
                   jax.ShapeDtypeStruct((n_layers, B, H), hidden.dtype),
                   jax.ShapeDtypeStruct((n_layers, B, H), cell.dtype)),
        grid_spec=pltpu.PrefetchScalarGridSpec(
            num_scalar_prefetch=0,
            grid=(n_layers, n_tb),
            in_specs=[
                pl.BlockSpec((t_blk * B, d_max), x_index),
                pl.BlockSpec((None, B, H), lambda l, tb: (l, 0, 0)),
                pl.BlockSpec((None, B, H), lambda l, tb: (l, 0, 0)),
                pl.BlockSpec((None, d_max, 4 * H), lambda l, tb: (l, 0, 0)),
                pl.BlockSpec((None, H, 4 * H), lambda l, tb: (l, 0, 0)),
                pl.BlockSpec((None, 1, 4 * H), lambda l, tb: (l, 0, 0)),
            ],
            out_specs=(
                pl.BlockSpec((t_blk * B, H), lambda l, tb: (tb, 0)),
                pl.BlockSpec((None, B, H), lambda l, tb: (l, 0, 0)),
                pl.BlockSpec((None, B, H), lambda l, tb: (l, 0, 0)),
            ),
            scratch_shapes=[
                pltpu.VMEM((T * B, d_max), jnp.float32),      # inter-layer seq
                pltpu.VMEM((t_blk * B, 4 * H), jnp.float32),  # hoisted x-proj
                pltpu.VMEM((B, H), jnp.float32),              # h state
                pltpu.VMEM((B, H), jnp.float32),              # c state
            ],
        ),
        compiler_params=pltpu.CompilerParams(
            dimension_semantics=("arbitrary", "arbitrary"),   # layer & time are
            vmem_limit_bytes=_vmem_budget_bytes(               # both sequential
                T, t_blk, B, d_max, H, x_bytes, w_bytes)),
    )(x2d, hidden, cell, wih_all, whh_all, b_all)

    output = jnp.transpose(y2d.reshape(T, B, H), (1, 0, 2))    # back to (B,T,H)
    return output, h_n, c_n


def init_lstm_params(key, inp_dim, hidden_dim, n_layers):
    """Deterministic init mimicking PyTorch uniform(-1/sqrt(H), 1/sqrt(H)),
    repacked to the fused layout (Din,4H)/(H,4H)/(1,4H) with gate order i,f,g,o."""
    k = 1.0 / np.sqrt(hidden_dim)
    params = []
    for l in range(n_layers):
        din = inp_dim if l == 0 else hidden_dim
        key, k1, k2, k3, k4 = jax.random.split(key, 5)
        # PyTorch layouts: weight_ih (4H, Din), weight_hh (4H, H), biases (4H,)
        w_ih = jax.random.uniform(k1, (4 * hidden_dim, din), jnp.float32, -k, k)
        w_hh = jax.random.uniform(k2, (4 * hidden_dim, hidden_dim), jnp.float32, -k, k)
        b_ih = jax.random.uniform(k3, (4 * hidden_dim,), jnp.float32, -k, k)
        b_hh = jax.random.uniform(k4, (4 * hidden_dim,), jnp.float32, -k, k)
        wih = jnp.transpose(w_ih)                                  # (Din, 4H)
        whh = jnp.transpose(w_hh)                                  # (H,   4H)
        b = (b_ih + b_hh).reshape(1, 4 * hidden_dim)               # (1,   4H)
        params.append((wih, whh, b))
    return params


def lstm_reference(X, hidden, cell, params):
    """Pure-JAX reference matching PyTorch LSTM semantics (eval mode)."""
    B, T, _ = X.shape
    n_layers, _, H = hidden.shape
    x = X
    hs, cs = [], []
    for l in range(n_layers):
        wih, whh, b = params[l]
        h, c = hidden[l], cell[l]
        outs = []
        for t in range(T):
            g = x[:, t, :] @ wih + h @ whh + b
            i_g = jax.nn.sigmoid(g[:, 0 * H:1 * H])
            f_g = jax.nn.sigmoid(g[:, 1 * H:2 * H])
            g_g = jnp.tanh(g[:, 2 * H:3 * H])
            o_g = jax.nn.sigmoid(g[:, 3 * H:4 * H])
            c = f_g * c + i_g * g_g
            h = o_g * jnp.tanh(c)
            outs.append(h)
        x = jnp.stack(outs, axis=1)
        hs.append(h)
        cs.append(c)
    return x, jnp.stack(hs), jnp.stack(cs)


if __name__ == "__main__":
    # Small shapes consistent with the module: (B, T, inp_dim), (n_layers, B, H)
    B, T = 2, 8
    inp_dim, hidden_dim, n_layers = 16, 32, 2   # 4H = 128 -> fully-populated lanes

    key = jax.random.PRNGKey(0)
    kx, kh, kc, kp = jax.random.split(key, 4)

    X = jax.random.normal(kx, (B, T, inp_dim), jnp.float32)
    hidden0 = jax.random.normal(kh, (n_layers, B, hidden_dim), jnp.float32)
    cell0 = jax.random.normal(kc, (n_layers, B, hidden_dim), jnp.float32)
    params = init_lstm_params(kp, inp_dim, hidden_dim, n_layers)

    # f32 MXU path: tight-tolerance check against the pure-JAX reference.
    output, hidden_f, cell_f = s2s2s_decoder_forward(X, hidden0, cell0, params)
    jax.block_until_ready((output, hidden_f, cell_f))

    ref_out, ref_h, ref_c = lstm_reference(X, hidden0, cell0, params)
    np.testing.assert_allclose(np.asarray(output), np.asarray(ref_out), rtol=1e-4, atol=1e-4)
    np.testing.assert_allclose(np.asarray(hidden_f), np.asarray(ref_h), rtol=1e-4, atol=1e-4)
    np.testing.assert_allclose(np.asarray(cell_f), np.asarray(ref_c), rtol=1e-4, atol=1e-4)

    # bf16 MXU-operand path (recommended production config on v6e/v7x):
    # weights + matmul inputs in bf16, f32 accumulation, f32 cell/gate math.
    out_bf, h_bf, c_bf = s2s2s_decoder_forward(
        X, hidden0, cell0, params, mxu_dtype=jnp.bfloat16)
    jax.block_until_ready((out_bf, h_bf, c_bf))
    np.testing.assert_allclose(np.asarray(out_bf), np.asarray(ref_out), rtol=3e-2, atol=3e-2)
    np.testing.assert_allclose(np.asarray(h_bf), np.asarray(ref_h), rtol=3e-2, atol=3e-2)
    np.testing.assert_allclose(np.asarray(c_bf), np.asarray(ref_c), rtol=3e-2, atol=3e-2)

    assert output.shape == (B, T, hidden_dim)
    assert hidden_f.shape == (n_layers, B, hidden_dim)
    assert cell_f.shape == (n_layers, B, hidden_dim)

    print("KERNEL_OK")
</pallas_src>

<mosaic_0001>
module attributes {stable_mosaic.version = 11 : i64} {
  func.func @_fused_lstm_kernel(%arg0: i32, %arg1: i32, %arg2: memref<16x32xf32, #tpu.memory_space<vmem>>, %arg3: memref<1x2x32xf32, #tpu.memory_space<vmem>>, %arg4: memref<1x2x32xf32, #tpu.memory_space<vmem>>, %arg5: memref<1x32x128xf32, #tpu.memory_space<vmem>>, %arg6: memref<1x32x128xf32, #tpu.memory_space<vmem>>, %arg7: memref<1x1x128xf32, #tpu.memory_space<vmem>>, %arg8: memref<16x32xf32, #tpu.memory_space<vmem>>, %arg9: memref<1x2x32xf32, #tpu.memory_space<vmem>>, %arg10: memref<1x2x32xf32, #tpu.memory_space<vmem>>, %arg11: memref<16x32xf32, #tpu.memory_space<vmem>>, %arg12: memref<16x128xf32, #tpu.memory_space<vmem>>, %arg13: memref<2x32xf32, #tpu.memory_space<vmem>>, %arg14: memref<2x32xf32, #tpu.memory_space<vmem>>) attributes {dimension_semantics = [#tpu.dimension_semantics<arbitrary>, #tpu.dimension_semantics<arbitrary>], iteration_bounds = array<i64: 2, 1>, scalar_prefetch = 0 : i64, scratch_operands = 4 : i64, tpu.core_type = #tpu.core_type<tc>, window_params = [{transform_indices = @transform_0, window_bounds = array<i64: 16, 32>}, {transform_indices = @transform_1, window_bounds = array<i64: 1, 2, 32>}, {transform_indices = @transform_2, window_bounds = array<i64: 1, 2, 32>}, {transform_indices = @transform_3, window_bounds = array<i64: 1, 32, 128>}, {transform_indices = @transform_4, window_bounds = array<i64: 1, 32, 128>}, {transform_indices = @transform_5, window_bounds = array<i64: 1, 1, 128>}, {transform_indices = @transform_6, window_bounds = array<i64: 16, 32>}, {transform_indices = @transform_7, window_bounds = array<i64: 1, 2, 32>}, {transform_indices = @transform_8, window_bounds = array<i64: 1, 2, 32>}]} {
    %c0_i32 = arith.constant 0 : i32
    %0 = arith.cmpi eq, %arg0, %c0_i32 : i32
    %c0_i32_0 = arith.constant 0 : i32
    %1 = arith.cmpi eq, %arg1, %c0_i32_0 : i32
    %2 = arith.andi %0, %1 : i1
    %3 = arith.extui %2 : i1 to i32
    %c0_i32_1 = arith.constant 0 : i32
    %4 = arith.cmpi ne, %3, %c0_i32_1 : i32
    scf.if %4 {
      %cst_136 = arith.constant 0.000000e+00 : f32
      %271 = vector.broadcast %cst_136 : f32 to vector<16x32xf32>
      %c0_137 = arith.constant 0 : index
      %c0_138 = arith.constant 0 : index
      %272 = vector.load %arg11[%c0_137, %c0_138] : memref<16x32xf32, #tpu.memory_space<vmem>>, vector<16x32xf32>
      tpu.vector_store %arg11[%c0_137, %c0_138], %271 {strides = array<i32>} : memref<16x32xf32, #tpu.memory_space<vmem>>, vector<16x32xf32>,
    } else {
    }
    %c0_i32_2 = arith.constant 0 : i32
    %5 = arith.cmpi eq, %arg1, %c0_i32_2 : i32
    %6 = arith.extui %5 : i1 to i32
    %c0_i32_3 = arith.constant 0 : i32
    %7 = arith.cmpi ne, %6, %c0_i32_3 : i32
    scf.if %7 {
      %c0_136 = arith.constant 0 : index
      %c0_137 = arith.constant 0 : index
      %c0_138 = arith.constant 0 : index
      %271 = vector.load %arg3[%c0_136, %c0_137, %c0_138] : memref<1x2x32xf32, #tpu.memory_space<vmem>>, vector<1x2x32xf32>
      %272 = vector.shape_cast %271 : vector<1x2x32xf32> to vector<2x32xf32>
      %c0_139 = arith.constant 0 : index
      %c0_140 = arith.constant 0 : index
      %273 = vector.load %arg13[%c0_139, %c0_140] : memref<2x32xf32, #tpu.memory_space<vmem>>, vector<2x32xf32>
      tpu.vector_store %arg13[%c0_139, %c0_140], %272 {strides = array<i32>} : memref<2x32xf32, #tpu.memory_space<vmem>>, vector<2x32xf32>,
      %c0_141 = arith.constant 0 : index
      %c0_142 = arith.constant 0 : index
      %c0_143 = arith.constant 0 : index
      %274 = vector.load %arg4[%c0_141, %c0_142, %c0_143] : memref<1x2x32xf32, #tpu.memory_space<vmem>>, vector<1x2x32xf32>
      %275 = vector.shape_cast %274 : vector<1x2x32xf32> to vector<2x32xf32>
      %c0_144 = arith.constant 0 : index
      %c0_145 = arith.constant 0 : index
      %276 = vector.load %arg14[%c0_144, %c0_145] : memref<2x32xf32, #tpu.memory_space<vmem>>, vector<2x32xf32>
      tpu.vector_store %arg14[%c0_144, %c0_145], %275 {strides = array<i32>} : memref<2x32xf32, #tpu.memory_space<vmem>>, vector<2x32xf32>,
    } else {
    }
    %c0 = arith.constant 0 : index
    %c0_4 = arith.constant 0 : index
    %c0_5 = arith.constant 0 : index
    %8 = vector.load %arg5[%c0, %c0_4, %c0_5] : memref<1x32x128xf32, #tpu.memory_space<vmem>>, vector<1x32x128xf32>
    %9 = vector.shape_cast %8 : vector<1x32x128xf32> to vector<32x128xf32>
    %c0_6 = arith.constant 0 : index
    %c0_7 = arith.constant 0 : index
    %c0_8 = arith.constant 0 : index
    %10 = vector.load %arg6[%c0_6, %c0_7, %c0_8] : memref<1x32x128xf32, #tpu.memory_space<vmem>>, vector<1x32x128xf32>
    %11 = vector.shape_cast %10 : vector<1x32x128xf32> to vector<32x128xf32>
    %c0_9 = arith.constant 0 : index
    %c0_10 = arith.constant 0 : index
    %c0_11 = arith.constant 0 : index
    %12 = vector.load %arg7[%c0_9, %c0_10, %c0_11] : memref<1x1x128xf32, #tpu.memory_space<vmem>>, vector<1x1x128xf32>
    %13 = vector.shape_cast %12 : vector<1x1x128xf32> to vector<1x128xf32>
    %c16_i32 = arith.constant 16 : i32
    %14 = arith.muli %arg1, %c16_i32 : i32
    %15 = tpu.assume_multiple %14, 16 : i32
    %c0_12 = arith.constant 0 : index
    %c0_13 = arith.constant 0 : index
    %16 = vector.load %arg2[%c0_12, %c0_13] : memref<16x32xf32, #tpu.memory_space<vmem>>, vector<16x32xf32>
    %17 = arith.index_cast %15 : i32 to index
    %c0_14 = arith.constant 0 : index
    %18 = vector.load %arg11[%17, %c0_14] : memref<16x32xf32, #tpu.memory_space<vmem>>, vector<16x32xf32>
    %c0_i32_15 = arith.constant 0 : i32
    %19 = arith.cmpi eq, %arg0, %c0_i32_15 : i32
    %20 = arith.select %19, %16, %18 : vector<16x32xf32>
    %cst = arith.constant dense<0.000000e+00> : vector<16x128xf32>
    %21 = tpu.matmul %20, %9, %cst {dimension_numbers = #tpu.dot_dimension_numbers<[1], [0], [0], [1], [0, 0, 1, 1], [], []>} : vector<16x32xf32>, vector<32x128xf32>, vector<16x128xf32> -> vector<16x128xf32>
    %22 = vector.broadcast %13 : vector<1x128xf32> to vector<16x128xf32>
    %23 = arith.addf %21, %22 : vector<16x128xf32>
    %c0_16 = arith.constant 0 : index
    %c0_17 = arith.constant 0 : index
    %24 = vector.load %arg12[%c0_16, %c0_17] : memref<16x128xf32, #tpu.memory_space<vmem>>, vector<16x128xf32>
    tpu.vector_store %arg12[%c0_16, %c0_17], %23 {strides = array<i32>} : memref<16x128xf32, #tpu.memory_space<vmem>>, vector<16x128xf32>,
    %c0_i32_18 = arith.constant 0 : i32
    %c2_i32 = arith.constant 2 : i32
    %25 = arith.muli %c0_i32_18, %c2_i32 : i32
    %26 = tpu.assume_multiple %25, 2 : i32
    %27 = arith.index_cast %26 : i32 to index
    %c0_19 = arith.constant 0 : index
    %28 = vector.load %arg12[%27, %c0_19] : memref<16x128xf32, #tpu.memory_space<vmem>>, vector<2x128xf32>
    %c0_20 = arith.constant 0 : index
    %c0_21 = arith.constant 0 : index
    %29 = vector.load %arg13[%c0_20, %c0_21] : memref<2x32xf32, #tpu.memory_space<vmem>>, vector<2x32xf32>
    %cst_22 = arith.constant dense<0.000000e+00> : vector<2x128xf32>
    %30 = tpu.matmul %29, %11, %cst_22 {dimension_numbers = #tpu.dot_dimension_numbers<[1], [0], [0], [1], [0, 0, 1, 1], [], []>} : vector<2x32xf32>, vector<32x128xf32>, vector<2x128xf32> -> vector<2x128xf32>
    %31 = arith.addf %28, %30 : vector<2x128xf32>
    %32 = arith.negf %31 : vector<2x128xf32>
    %33 = math.exp %32 : vector<2x128xf32>
    %cst_23 = arith.constant 1.000000e+00 : f32
    %34 = vector.broadcast %cst_23 : f32 to vector<2x128xf32>
    %35 = arith.addf %34, %33 : vector<2x128xf32>
    %36 = arith.divf %34, %35 : vector<2x128xf32>
    %37 = math.tanh %31 : vector<2x128xf32>
    %38 = vector.extract_strided_slice %36 {offsets = [0, 0], sizes = [2, 32], strides = [1, 1]} : vector<2x128xf32> to vector<2x32xf32>
    %39 = vector.extract_strided_slice %36 {offsets = [0, 32], sizes = [2, 32], strides = [1, 1]} : vector<2x128xf32> to vector<2x32xf32>
    %40 = vector.extract_strided_slice %37 {offsets = [0, 64], sizes = [2, 32], strides = [1, 1]} : vector<2x128xf32> to vector<2x32xf32>
    %41 = vector.extract_strided_slice %36 {offsets = [0, 96], sizes = [2, 32], strides = [1, 1]} : vector<2x128xf32> to vector<2x32xf32>
    %c0_24 = arith.constant 0 : index
    %c0_25 = arith.constant 0 : index
    %42 = vector.load %arg14[%c0_24, %c0_25] : memref<2x32xf32, #tpu.memory_space<vmem>>, vector<2x32xf32>
    %43 = arith.mulf %39, %42 : vector<2x32xf32>
    %44 = arith.mulf %38, %40 : vector<2x32xf32>
    %45 = arith.addf %43, %44 : vector<2x32xf32>
    %46 = math.tanh %45 : vector<2x32xf32>
    %47 = arith.mulf %41, %46 : vector<2x32xf32>
    %c0_26 = arith.constant 0 : index
    %c0_27 = arith.constant 0 : index
    %48 = vector.load %arg14[%c0_26, %c0_27] : memref<2x32xf32, #tpu.memory_space<vmem>>, vector<2x32xf32>
    tpu.vector_store %arg14[%c0_26, %c0_27], %45 {strides = array<i32>} : memref<2x32xf32, #tpu.memory_space<vmem>>, vector<2x32xf32>,
    %c0_28 = arith.constant 0 : index
    %c0_29 = arith.constant 0 : index
    %49 = vector.load %arg13[%c0_28, %c0_29] : memref<2x32xf32, #tpu.memory_space<vmem>>, vector<2x32xf32>
    tpu.vector_store %arg13[%c0_28, %c0_29], %47 {strides = array<i32>} : memref<2x32xf32, #tpu.memory_space<vmem>>, vector<2x32xf32>,
    %c2_i32_30 = arith.constant 2 : i32
    %50 = arith.muli %c0_i32_18, %c2_i32_30 : i32
    %51 = arith.addi %15, %50 : i32
    %52 = tpu.assume_multiple %51, 2 : i32
    %53 = arith.index_cast %52 : i32 to index
    %c0_31 = arith.constant 0 : index
    %54 = vector.load %arg11[%53, %c0_31] : memref<16x32xf32, #tpu.memory_space<vmem>>, vector<2x32xf32>
    tpu.vector_store %arg11[%53, %c0_31], %47 {strides = array<i32>} : memref<16x32xf32, #tpu.memory_space<vmem>>, vector<2x32xf32>,
    %c1_i32 = arith.constant 1 : i32
    %c2_i32_32 = arith.constant 2 : i32
    %55 = arith.muli %c1_i32, %c2_i32_32 : i32
    %56 = tpu.assume_multiple %55, 2 : i32
    %57 = arith.index_cast %56 : i32 to index
    %c0_33 = arith.constant 0 : index
    %58 = vector.load %arg12[%57, %c0_33] : memref<16x128xf32, #tpu.memory_space<vmem>>, vector<2x128xf32>
    %c0_34 = arith.constant 0 : index
    %c0_35 = arith.constant 0 : index
    %59 = vector.load %arg13[%c0_34, %c0_35] : memref<2x32xf32, #tpu.memory_space<vmem>>, vector<2x32xf32>
    %cst_36 = arith.constant dense<0.000000e+00> : vector<2x128xf32>
    %60 = tpu.matmul %59, %11, %cst_36 {dimension_numbers = #tpu.dot_dimension_numbers<[1], [0], [0], [1], [0, 0, 1, 1], [], []>} : vector<2x32xf32>, vector<32x128xf32>, vector<2x128xf32> -> vector<2x128xf32>
    %61 = arith.addf %58, %60 : vector<2x128xf32>
    %62 = arith.negf %61 : vector<2x128xf32>
    %63 = math.exp %62 : vector<2x128xf32>
    %cst_37 = arith.constant 1.000000e+00 : f32
    %64 = vector.broadcast %cst_37 : f32 to vector<2x128xf32>
    %65 = arith.addf %64, %63 : vector<2x128xf32>
    %66 = arith.divf %64, %65 : vector<2x128xf32>
    %67 = math.tanh %61 : vector<2x128xf32>
    %68 = vector.extract_strided_slice %66 {offsets = [0, 0], sizes = [2, 32], strides = [1, 1]} : vector<2x128xf32> to vector<2x32xf32>
    %69 = vector.extract_strided_slice %66 {offsets = [0, 32], sizes = [2, 32], strides = [1, 1]} : vector<2x128xf32> to vector<2x32xf32>
    %70 = vector.extract_strided_slice %67 {offsets = [0, 64], sizes = [2, 32], strides = [1, 1]} : vector<2x128xf32> to vector<2x32xf32>
    %71 = vector.extract_strided_slice %66 {offsets = [0, 96], sizes = [2, 32], strides = [1, 1]} : vector<2x128xf32> to vector<2x32xf32>
    %c0_38 = arith.constant 0 : index
    %c0_39 = arith.constant 0 : index
    %72 = vector.load %arg14[%c0_38, %c0_39] : memref<2x32xf32, #tpu.memory_space<vmem>>, vector<2x32xf32>
    %73 = arith.mulf %69, %72 : vector<2x32xf32>
    %74 = arith.mulf %68, %70 : vector<2x32xf32>
    %75 = arith.addf %73, %74 : vector<2x32xf32>
    %76 = math.tanh %75 : vector<2x32xf32>
    %77 = arith.mulf %71, %76 : vector<2x32xf32>
    %c0_40 = arith.constant 0 : index
    %c0_41 = arith.constant 0 : index
    %78 = vector.load %arg14[%c0_40, %c0_41] : memref<2x32xf32, #tpu.memory_space<vmem>>, vector<2x32xf32>
    tpu.vector_store %arg14[%c0_40, %c0_41], %75 {strides = array<i32>} : memref<2x32xf32, #tpu.memory_space<vmem>>, vector<2x32xf32>,
    %c0_42 = arith.constant 0 : index
    %c0_43 = arith.constant 0 : index
    %79 = vector.load %arg13[%c0_42, %c0_43] : memref<2x32xf32, #tpu.memory_space<vmem>>, vector<2x32xf32>
    tpu.vector_store %arg13[%c0_42, %c0_43], %77 {strides = array<i32>} : memref<2x32xf32, #tpu.memory_space<vmem>>, vector<2x32xf32>,
    %c2_i32_44 = arith.constant 2 : i32
    %80 = arith.muli %c1_i32, %c2_i32_44 : i32
    %81 = arith.addi %15, %80 : i32
    %82 = tpu.assume_multiple %81, 2 : i32
    %83 = arith.index_cast %82 : i32 to index
    %c0_45 = arith.constant 0 : index
    %84 = vector.load %arg11[%83, %c0_45] : memref<16x32xf32, #tpu.memory_space<vmem>>, vector<2x32xf32>
    tpu.vector_store %arg11[%83, %c0_45], %77 {strides = array<i32>} : memref<16x32xf32, #tpu.memory_space<vmem>>, vector<2x32xf32>,
    %c2_i32_46 = arith.constant 2 : i32
    %c2_i32_47 = arith.constant 2 : i32
    %85 = arith.muli %c2_i32_46, %c2_i32_47 : i32
    %86 = tpu.assume_multiple %85, 2 : i32
    %87 = arith.index_cast %86 : i32 to index
    %c0_48 = arith.constant 0 : index
    %88 = vector.load %arg12[%87, %c0_48] : memref<16x128xf32, #tpu.memory_space<vmem>>, vector<2x128xf32>
    %c0_49 = arith.constant 0 : index
    %c0_50 = arith.constant 0 : index
    %89 = vector.load %arg13[%c0_49, %c0_50] : memref<2x32xf32, #tpu.memory_space<vmem>>, vector<2x32xf32>
    %cst_51 = arith.constant dense<0.000000e+00> : vector<2x128xf32>
    %90 = tpu.matmul %89, %11, %cst_51 {dimension_numbers = #tpu.dot_dimension_numbers<[1], [0], [0], [1], [0, 0, 1, 1], [], []>} : vector<2x32xf32>, vector<32x128xf32>, vector<2x128xf32> -> vector<2x128xf32>
    %91 = arith.addf %88, %90 : vector<2x128xf32>
    %92 = arith.negf %91 : vector<2x128xf32>
    %93 = math.exp %92 : vector<2x128xf32>
    %cst_52 = arith.constant 1.000000e+00 : f32
    %94 = vector.broadcast %cst_52 : f32 to vector<2x128xf32>
    %95 = arith.addf %94, %93 : vector<2x128xf32>
    %96 = arith.divf %94, %95 : vector<2x128xf32>
    %97 = math.tanh %91 : vector<2x128xf32>
    %98 = vector.extract_strided_slice %96 {offsets = [0, 0], sizes = [2, 32], strides = [1, 1]} : vector<2x128xf32> to vector<2x32xf32>
    %99 = vector.extract_strided_slice %96 {offsets = [0, 32], sizes = [2, 32], strides = [1, 1]} : vector<2x128xf32> to vector<2x32xf32>
    %100 = vector.extract_strided_slice %97 {offsets = [0, 64], sizes = [2, 32], strides = [1, 1]} : vector<2x128xf32> to vector<2x32xf32>
    %101 = vector.extract_strided_slice %96 {offsets = [0, 96], sizes = [2, 32], strides = [1, 1]} : vector<2x128xf32> to vector<2x32xf32>
    %c0_53 = arith.constant 0 : index
    %c0_54 = arith.constant 0 : index
    %102 = vector.load %arg14[%c0_53, %c0_54] : memref<2x32xf32, #tpu.memory_space<vmem>>, vector<2x32xf32>
    %103 = arith.mulf %99, %102 : vector<2x32xf32>
    %104 = arith.mulf %98, %100 : vector<2x32xf32>
    %105 = arith.addf %103, %104 : vector<2x32xf32>
    %106 = math.tanh %105 : vector<2x32xf32>
    %107 = arith.mulf %101, %106 : vector<2x32xf32>
    %c0_55 = arith.constant 0 : index
    %c0_56 = arith.constant 0 : index
    %108 = vector.load %arg14[%c0_55, %c0_56] : memref<2x32xf32, #tpu.memory_space<vmem>>, vector<2x32xf32>
    tpu.vector_store %arg14[%c0_55, %c0_56], %105 {strides = array<i32>} : memref<2x32xf32, #tpu.memory_space<vmem>>, vector<2x32xf32>,
    %c0_57 = arith.constant 0 : index
    %c0_58 = arith.constant 0 : index
    %109 = vector.load %arg13[%c0_57, %c0_58] : memref<2x32xf32, #tpu.memory_space<vmem>>, vector<2x32xf32>
    tpu.vector_store %arg13[%c0_57, %c0_58], %107 {strides = array<i32>} : memref<2x32xf32, #tpu.memory_space<vmem>>, vector<2x32xf32>,
    %c2_i32_59 = arith.constant 2 : i32
    %110 = arith.muli %c2_i32_46, %c2_i32_59 : i32
    %111 = arith.addi %15, %110 : i32
    %112 = tpu.assume_multiple %111, 2 : i32
    %113 = arith.index_cast %112 : i32 to index
    %c0_60 = arith.constant 0 : index
    %114 = vector.load %arg11[%113, %c0_60] : memref<16x32xf32, #tpu.memory_space<vmem>>, vector<2x32xf32>
    tpu.vector_store %arg11[%113, %c0_60], %107 {strides = array<i32>} : memref<16x32xf32, #tpu.memory_space<vmem>>, vector<2x32xf32>,
    %c3_i32 = arith.constant 3 : i32
    %c2_i32_61 = arith.constant 2 : i32
    %115 = arith.muli %c3_i32, %c2_i32_61 : i32
    %116 = tpu.assume_multiple %115, 2 : i32
    %117 = arith.index_cast %116 : i32 to index
    %c0_62 = arith.constant 0 : index
    %118 = vector.load %arg12[%117, %c0_62] : memref<16x128xf32, #tpu.memory_space<vmem>>, vector<2x128xf32>
    %c0_63 = arith.constant 0 : index
    %c0_64 = arith.constant 0 : index
    %119 = vector.load %arg13[%c0_63, %c0_64] : memref<2x32xf32, #tpu.memory_space<vmem>>, vector<2x32xf32>
    %cst_65 = arith.constant dense<0.000000e+00> : vector<2x128xf32>
    %120 = tpu.matmul %119, %11, %cst_65 {dimension_numbers = #tpu.dot_dimension_numbers<[1], [0], [0], [1], [0, 0, 1, 1], [], []>} : vector<2x32xf32>, vector<32x128xf32>, vector<2x128xf32> -> vector<2x128xf32>
    %121 = arith.addf %118, %120 : vector<2x128xf32>
    %122 = arith.negf %121 : vector<2x128xf32>
    %123 = math.exp %122 : vector<2x128xf32>
    %cst_66 = arith.constant 1.000000e+00 : f32
    %124 = vector.broadcast %cst_66 : f32 to vector<2x128xf32>
    %125 = arith.addf %124, %123 : vector<2x128xf32>
    %126 = arith.divf %124, %125 : vector<2x128xf32>
    %127 = math.tanh %121 : vector<2x128xf32>
    %128 = vector.extract_strided_slice %126 {offsets = [0, 0], sizes = [2, 32], strides = [1, 1]} : vector<2x128xf32> to vector<2x32xf32>
    %129 = vector.extract_strided_slice %126 {offsets = [0, 32], sizes = [2, 32], strides = [1, 1]} : vector<2x128xf32> to vector<2x32xf32>
    %130 = vector.extract_strided_slice %127 {offsets = [0, 64], sizes = [2, 32], strides = [1, 1]} : vector<2x128xf32> to vector<2x32xf32>
    %131 = vector.extract_strided_slice %126 {offsets = [0, 96], sizes = [2, 32], strides = [1, 1]} : vector<2x128xf32> to vector<2x32xf32>
    %c0_67 = arith.constant 0 : index
    %c0_68 = arith.constant 0 : index
    %132 = vector.load %arg14[%c0_67, %c0_68] : memref<2x32xf32, #tpu.memory_space<vmem>>, vector<2x32xf32>
    %133 = arith.mulf %129, %132 : vector<2x32xf32>
    %134 = arith.mulf %128, %130 : vector<2x32xf32>
    %135 = arith.addf %133, %134 : vector<2x32xf32>
    %136 = math.tanh %135 : vector<2x32xf32>
    %137 = arith.mulf %131, %136 : vector<2x32xf32>
    %c0_69 = arith.constant 0 : index
    %c0_70 = arith.constant 0 : index
    %138 = vector.load %arg14[%c0_69, %c0_70] : memref<2x32xf32, #tpu.memory_space<vmem>>, vector<2x32xf32>
    tpu.vector_store %arg14[%c0_69, %c0_70], %135 {strides = array<i32>} : memref<2x32xf32, #tpu.memory_space<vmem>>, vector<2x32xf32>,
    %c0_71 = arith.constant 0 : index
    %c0_72 = arith.constant 0 : index
    %139 = vector.load %arg13[%c0_71, %c0_72] : memref<2x32xf32, #tpu.memory_space<vmem>>, vector<2x32xf32>
    tpu.vector_store %arg13[%c0_71, %c0_72], %137 {strides = array<i32>} : memref<2x32xf32, #tpu.memory_space<vmem>>, vector<2x32xf32>,
    %c2_i32_73 = arith.constant 2 : i32
    %140 = arith.muli %c3_i32, %c2_i32_73 : i32
    %141 = arith.addi %15, %140 : i32
    %142 = tpu.assume_multiple %141, 2 : i32
    %143 = arith.index_cast %142 : i32 to index
    %c0_74 = arith.constant 0 : index
    %144 = vector.load %arg11[%143, %c0_74] : memref<16x32xf32, #tpu.memory_space<vmem>>, vector<2x32xf32>
    tpu.vector_store %arg11[%143, %c0_74], %137 {strides = array<i32>} : memref<16x32xf32, #tpu.memory_space<vmem>>, vector<2x32xf32>,
    %c4_i32 = arith.constant 4 : i32
    %c2_i32_75 = arith.constant 2 : i32
    %145 = arith.muli %c4_i32, %c2_i32_75 : i32
    %146 = tpu.assume_multiple %145, 2 : i32
    %147 = arith.index_cast %146 : i32 to index
    %c0_76 = arith.constant 0 : index
    %148 = vector.load %arg12[%147, %c0_76] : memref<16x128xf32, #tpu.memory_space<vmem>>, vector<2x128xf32>
    %c0_77 = arith.constant 0 : index
    %c0_78 = arith.constant 0 : index
    %149 = vector.load %arg13[%c0_77, %c0_78] : memref<2x32xf32, #tpu.memory_space<vmem>>, vector<2x32xf32>
    %cst_79 = arith.constant dense<0.000000e+00> : vector<2x128xf32>
    %150 = tpu.matmul %149, %11, %cst_79 {dimension_numbers = #tpu.dot_dimension_numbers<[1], [0], [0], [1], [0, 0, 1, 1], [], []>} : vector<2x32xf32>, vector<32x128xf32>, vector<2x128xf32> -> vector<2x128xf32>
    %151 = arith.addf %148, %150 : vector<2x128xf32>
    %152 = arith.negf %151 : vector<2x128xf32>
    %153 = math.exp %152 : vector<2x128xf32>
    %cst_80 = arith.constant 1.000000e+00 : f32
    %154 = vector.broadcast %cst_80 : f32 to vector<2x128xf32>
    %155 = arith.addf %154, %153 : vector<2x128xf32>
    %156 = arith.divf %154, %155 : vector<2x128xf32>
    %157 = math.tanh %151 : vector<2x128xf32>
    %158 = vector.extract_strided_slice %156 {offsets = [0, 0], sizes = [2, 32], strides = [1, 1]} : vector<2x128xf32> to vector<2x32xf32>
    %159 = vector.extract_strided_slice %156 {offsets = [0, 32], sizes = [2, 32], strides = [1, 1]} : vector<2x128xf32> to vector<2x32xf32>
    %160 = vector.extract_strided_slice %157 {offsets = [0, 64], sizes = [2, 32], strides = [1, 1]} : vector<2x128xf32> to vector<2x32xf32>
    %161 = vector.extract_strided_slice %156 {offsets = [0, 96], sizes = [2, 32], strides = [1, 1]} : vector<2x128xf32> to vector<2x32xf32>
    %c0_81 = arith.constant 0 : index
    %c0_82 = arith.constant 0 : index
    %162 = vector.load %arg14[%c0_81, %c0_82] : memref<2x32xf32, #tpu.memory_space<vmem>>, vector<2x32xf32>
    %163 = arith.mulf %159, %162 : vector<2x32xf32>
    %164 = arith.mulf %158, %160 : vector<2x32xf32>
    %165 = arith.addf %163, %164 : vector<2x32xf32>
    %166 = math.tanh %165 : vector<2x32xf32>
    %167 = arith.mulf %161, %166 : vector<2x32xf32>
    %c0_83 = arith.constant 0 : index
    %c0_84 = arith.constant 0 : index
    %168 = vector.load %arg14[%c0_83, %c0_84] : memref<2x32xf32, #tpu.memory_space<vmem>>, vector<2x32xf32>
    tpu.vector_store %arg14[%c0_83, %c0_84], %165 {strides = array<i32>} : memref<2x32xf32, #tpu.memory_space<vmem>>, vector<2x32xf32>,
    %c0_85 = arith.constant 0 : index
    %c0_86 = arith.constant 0 : index
    %169 = vector.load %arg13[%c0_85, %c0_86] : memref<2x32xf32, #tpu.memory_space<vmem>>, vector<2x32xf32>
    tpu.vector_store %arg13[%c0_85, %c0_86], %167 {strides = array<i32>} : memref<2x32xf32, #tpu.memory_space<vmem>>, vector<2x32xf32>,
    %c2_i32_87 = arith.constant 2 : i32
    %170 = arith.muli %c4_i32, %c2_i32_87 : i32
    %171 = arith.addi %15, %170 : i32
    %172 = tpu.assume_multiple %171, 2 : i32
    %173 = arith.index_cast %172 : i32 to index
    %c0_88 = arith.constant 0 : index
    %174 = vector.load %arg11[%173, %c0_88] : memref<16x32xf32, #tpu.memory_space<vmem>>, vector<2x32xf32>
    tpu.vector_store %arg11[%173, %c0_88], %167 {strides = array<i32>} : memref<16x32xf32, #tpu.memory_space<vmem>>, vector<2x32xf32>,
    %c5_i32 = arith.constant 5 : i32
    %c2_i32_89 = arith.constant 2 : i32
    %175 = arith.muli %c5_i32, %c2_i32_89 : i32
    %176 = tpu.assume_multiple %175, 2 : i32
    %177 = arith.index_cast %176 : i32 to index
    %c0_90 = arith.constant 0 : index
    %178 = vector.load %arg12[%177, %c0_90] : memref<16x128xf32, #tpu.memory_space<vmem>>, vector<2x128xf32>
    %c0_91 = arith.constant 0 : index
    %c0_92 = arith.constant 0 : index
    %179 = vector.load %arg13[%c0_91, %c0_92] : memref<2x32xf32, #tpu.memory_space<vmem>>, vector<2x32xf32>
    %cst_93 = arith.constant dense<0.000000e+00> : vector<2x128xf32>
    %180 = tpu.matmul %179, %11, %cst_93 {dimension_numbers = #tpu.dot_dimension_numbers<[1], [0], [0], [1], [0, 0, 1, 1], [], []>} : vector<2x32xf32>, vector<32x128xf32>, vector<2x128xf32> -> vector<2x128xf32>
    %181 = arith.addf %178, %180 : vector<2x128xf32>
    %182 = arith.negf %181 : vector<2x128xf32>
    %183 = math.exp %182 : vector<2x128xf32>
    %cst_94 = arith.constant 1.000000e+00 : f32
    %184 = vector.broadcast %cst_94 : f32 to vector<2x128xf32>
    %185 = arith.addf %184, %183 : vector<2x128xf32>
    %186 = arith.divf %184, %185 : vector<2x128xf32>
    %187 = math.tanh %181 : vector<2x128xf32>
    %188 = vector.extract_strided_slice %186 {offsets = [0, 0], sizes = [2, 32], strides = [1, 1]} : vector<2x128xf32> to vector<2x32xf32>
    %189 = vector.extract_strided_slice %186 {offsets = [0, 32], sizes = [2, 32], strides = [1, 1]} : vector<2x128xf32> to vector<2x32xf32>
    %190 = vector.extract_strided_slice %187 {offsets = [0, 64], sizes = [2, 32], strides = [1, 1]} : vector<2x128xf32> to vector<2x32xf32>
    %191 = vector.extract_strided_slice %186 {offsets = [0, 96], sizes = [2, 32], strides = [1, 1]} : vector<2x128xf32> to vector<2x32xf32>
    %c0_95 = arith.constant 0 : index
    %c0_96 = arith.constant 0 : index
    %192 = vector.load %arg14[%c0_95, %c0_96] : memref<2x32xf32, #tpu.memory_space<vmem>>, vector<2x32xf32>
    %193 = arith.mulf %189, %192 : vector<2x32xf32>
    %194 = arith.mulf %188, %190 : vector<2x32xf32>
    %195 = arith.addf %193, %194 : vector<2x32xf32>
    %196 = math.tanh %195 : vector<2x32xf32>
    %197 = arith.mulf %191, %196 : vector<2x32xf32>
    %c0_97 = arith.constant 0 : index
    %c0_98 = arith.constant 0 : index
    %198 = vector.load %arg14[%c0_97, %c0_98] : memref<2x32xf32, #tpu.memory_space<vmem>>, vector<2x32xf32>
    tpu.vector_store %arg14[%c0_97, %c0_98], %195 {strides = array<i32>} : memref<2x32xf32, #tpu.memory_space<vmem>>, vector<2x32xf32>,
    %c0_99 = arith.constant 0 : index
    %c0_100 = arith.constant 0 : index
    %199 = vector.load %arg13[%c0_99, %c0_100] : memref<2x32xf32, #tpu.memory_space<vmem>>, vector<2x32xf32>
    tpu.vector_store %arg13[%c0_99, %c0_100], %197 {strides = array<i32>} : memref<2x32xf32, #tpu.memory_space<vmem>>, vector<2x32xf32>,
    %c2_i32_101 = arith.constant 2 : i32
    %200 = arith.muli %c5_i32, %c2_i32_101 : i32
    %201 = arith.addi %15, %200 : i32
    %202 = tpu.assume_multiple %201, 2 : i32
    %203 = arith.index_cast %202 : i32 to index
    %c0_102 = arith.constant 0 : index
    %204 = vector.load %arg11[%203, %c0_102] : memref<16x32xf32, #tpu.memory_space<vmem>>, vector<2x32xf32>
    tpu.vector_store %arg11[%203, %c0_102], %197 {strides = array<i32>} : memref<16x32xf32, #tpu.memory_space<vmem>>, vector<2x32xf32>,
    %c6_i32 = arith.constant 6 : i32
    %c2_i32_103 = arith.constant 2 : i32
    %205 = arith.muli %c6_i32, %c2_i32_103 : i32
    %206 = tpu.assume_multiple %205, 2 : i32
    %207 = arith.index_cast %206 : i32 to index
    %c0_104 = arith.constant 0 : index
    %208 = vector.load %arg12[%207, %c0_104] : memref<16x128xf32, #tpu.memory_space<vmem>>, vector<2x128xf32>
    %c0_105 = arith.constant 0 : index
    %c0_106 = arith.constant 0 : index
    %209 = vector.load %arg13[%c0_105, %c0_106] : memref<2x32xf32, #tpu.memory_space<vmem>>, vector<2x32xf32>
    %cst_107 = arith.constant dense<0.000000e+00> : vector<2x128xf32>
    %210 = tpu.matmul %209, %11, %cst_107 {dimension_numbers = #tpu.dot_dimension_numbers<[1], [0], [0], [1], [0, 0, 1, 1], [], []>} : vector<2x32xf32>, vector<32x128xf32>, vector<2x128xf32> -> vector<2x128xf32>
    %211 = arith.addf %208, %210 : vector<2x128xf32>
    %212 = arith.negf %211 : vector<2x128xf32>
    %213 = math.exp %212 : vector<2x128xf32>
    %cst_108 = arith.constant 1.000000e+00 : f32
    %214 = vector.broadcast %cst_108 : f32 to vector<2x128xf32>
    %215 = arith.addf %214, %213 : vector<2x128xf32>
    %216 = arith.divf %214, %215 : vector<2x128xf32>
    %217 = math.tanh %211 : vector<2x128xf32>
    %218 = vector.extract_strided_slice %216 {offsets = [0, 0], sizes = [2, 32], strides = [1, 1]} : vector<2x128xf32> to vector<2x32xf32>
    %219 = vector.extract_strided_slice %216 {offsets = [0, 32], sizes = [2, 32], strides = [1, 1]} : vector<2x128xf32> to vector<2x32xf32>
    %220 = vector.extract_strided_slice %217 {offsets = [0, 64], sizes = [2, 32], strides = [1, 1]} : vector<2x128xf32> to vector<2x32xf32>
    %221 = vector.extract_strided_slice %216 {offsets = [0, 96], sizes = [2, 32], strides = [1, 1]} : vector<2x128xf32> to vector<2x32xf32>
    %c0_109 = arith.constant 0 : index
    %c0_110 = arith.constant 0 : index
    %222 = vector.load %arg14[%c0_109, %c0_110] : memref<2x32xf32, #tpu.memory_space<vmem>>, vector<2x32xf32>
    %223 = arith.mulf %219, %222 : vector<2x32xf32>
    %224 = arith.mulf %218, %220 : vector<2x32xf32>
    %225 = arith.addf %223, %224 : vector<2x32xf32>
    %226 = math.tanh %225 : vector<2x32xf32>
    %227 = arith.mulf %221, %226 : vector<2x32xf32>
    %c0_111 = arith.constant 0 : index
    %c0_112 = arith.constant 0 : index
    %228 = vector.load %arg14[%c0_111, %c0_112] : memref<2x32xf32, #tpu.memory_space<vmem>>, vector<2x32xf32>
    tpu.vector_store %arg14[%c0_111, %c0_112], %225 {strides = array<i32>} : memref<2x32xf32, #tpu.memory_space<vmem>>, vector<2x32xf32>,
    %c0_113 = arith.constant 0 : index
    %c0_114 = arith.constant 0 : index
    %229 = vector.load %arg13[%c0_113, %c0_114] : memref<2x32xf32, #tpu.memory_space<vmem>>, vector<2x32xf32>
    tpu.vector_store %arg13[%c0_113, %c0_114], %227 {strides = array<i32>} : memref<2x32xf32, #tpu.memory_space<vmem>>, vector<2x32xf32>,
    %c2_i32_115 = arith.constant 2 : i32
    %230 = arith.muli %c6_i32, %c2_i32_115 : i32
    %231 = arith.addi %15, %230 : i32
    %232 = tpu.assume_multiple %231, 2 : i32
    %233 = arith.index_cast %232 : i32 to index
    %c0_116 = arith.constant 0 : index
    %234 = vector.load %arg11[%233, %c0_116] : memref<16x32xf32, #tpu.memory_space<vmem>>, vector<2x32xf32>
    tpu.vector_store %arg11[%233, %c0_116], %227 {strides = array<i32>} : memref<16x32xf32, #tpu.memory_space<vmem>>, vector<2x32xf32>,
    %c7_i32 = arith.constant 7 : i32
    %c2_i32_117 = arith.constant 2 : i32
    %235 = arith.muli %c7_i32, %c2_i32_117 : i32
    %236 = tpu.assume_multiple %235, 2 : i32
    %237 = arith.index_cast %236 : i32 to index
    %c0_118 = arith.constant 0 : index
    %238 = vector.load %arg12[%237, %c0_118] : memref<16x128xf32, #tpu.memory_space<vmem>>, vector<2x128xf32>
    %c0_119 = arith.constant 0 : index
    %c0_120 = arith.constant 0 : index
    %239 = vector.load %arg13[%c0_119, %c0_120] : memref<2x32xf32, #tpu.memory_space<vmem>>, vector<2x32xf32>
    %cst_121 = arith.constant dense<0.000000e+00> : vector<2x128xf32>
    %240 = tpu.matmul %239, %11, %cst_121 {dimension_numbers = #tpu.dot_dimension_numbers<[1], [0], [0], [1], [0, 0, 1, 1], [], []>} : vector<2x32xf32>, vector<32x128xf32>, vector<2x128xf32> -> vector<2x128xf32>
    %241 = arith.addf %238, %240 : vector<2x128xf32>
    %242 = arith.negf %241 : vector<2x128xf32>
    %243 = math.exp %242 : vector<2x128xf32>
    %cst_122 = arith.constant 1.000000e+00 : f32
    %244 = vector.broadcast %cst_122 : f32 to vector<2x128xf32>
    %245 = arith.addf %244, %243 : vector<2x128xf32>
    %246 = arith.divf %244, %245 : vector<2x128xf32>
    %247 = math.tanh %241 : vector<2x128xf32>
    %248 = vector.extract_strided_slice %246 {offsets = [0, 0], sizes = [2, 32], strides = [1, 1]} : vector<2x128xf32> to vector<2x32xf32>
    %249 = vector.extract_strided_slice %246 {offsets = [0, 32], sizes = [2, 32], strides = [1, 1]} : vector<2x128xf32> to vector<2x32xf32>
    %250 = vector.extract_strided_slice %247 {offsets = [0, 64], sizes = [2, 32], strides = [1, 1]} : vector<2x128xf32> to vector<2x32xf32>
    %251 = vector.extract_strided_slice %246 {offsets = [0, 96], sizes = [2, 32], strides = [1, 1]} : vector<2x128xf32> to vector<2x32xf32>
    %c0_123 = arith.constant 0 : index
    %c0_124 = arith.constant 0 : index
    %252 = vector.load %arg14[%c0_123, %c0_124] : memref<2x32xf32, #tpu.memory_space<vmem>>, vector<2x32xf32>
    %253 = arith.mulf %249, %252 : vector<2x32xf32>
    %254 = arith.mulf %248, %250 : vector<2x32xf32>
    %255 = arith.addf %253, %254 : vector<2x32xf32>
    %256 = math.tanh %255 : vector<2x32xf32>
    %257 = arith.mulf %251, %256 : vector<2x32xf32>
    %c0_125 = arith.constant 0 : index
    %c0_126 = arith.constant 0 : index
    %258 = vector.load %arg14[%c0_125, %c0_126] : memref<2x32xf32, #tpu.memory_space<vmem>>, vector<2x32xf32>
    tpu.vector_store %arg14[%c0_125, %c0_126], %255 {strides = array<i32>} : memref<2x32xf32, #tpu.memory_space<vmem>>, vector<2x32xf32>,
    %c0_127 = arith.constant 0 : index
    %c0_128 = arith.constant 0 : index
    %259 = vector.load %arg13[%c0_127, %c0_128] : memref<2x32xf32, #tpu.memory_space<vmem>>, vector<2x32xf32>
    tpu.vector_store %arg13[%c0_127, %c0_128], %257 {strides = array<i32>} : memref<2x32xf32, #tpu.memory_space<vmem>>, vector<2x32xf32>,
    %c2_i32_129 = arith.constant 2 : i32
    %260 = arith.muli %c7_i32, %c2_i32_129 : i32
    %261 = arith.addi %15, %260 : i32
    %262 = tpu.assume_multiple %261, 2 : i32
    %263 = arith.index_cast %262 : i32 to index
    %c0_130 = arith.constant 0 : index
    %264 = vector.load %arg11[%263, %c0_130] : memref<16x32xf32, #tpu.memory_space<vmem>>, vector<2x32xf32>
    tpu.vector_store %arg11[%263, %c0_130], %257 {strides = array<i32>} : memref<16x32xf32, #tpu.memory_space<vmem>>, vector<2x32xf32>,
    %c8_i32 = arith.constant 8 : i32
    %265 = arith.index_cast %15 : i32 to index
    %c0_131 = arith.constant 0 : index
    %266 = vector.load %arg11[%265, %c0_131] : memref<16x32xf32, #tpu.memory_space<vmem>>, vector<16x32xf32>
    %c0_132 = arith.constant 0 : index
    %c0_133 = arith.constant 0 : index
    %267 = vector.load %arg8[%c0_132, %c0_133] : memref<16x32xf32, #tpu.memory_space<vmem>>, vector<16x32xf32>
    tpu.vector_store %arg8[%c0_132, %c0_133], %266 {strides = array<i32>} : memref<16x32xf32, #tpu.memory_space<vmem>>, vector<16x32xf32>,
    %c0_i32_134 = arith.constant 0 : i32
    %268 = arith.cmpi eq, %arg1, %c0_i32_134 : i32
    %269 = arith.extui %268 : i1 to i32
    %c0_i32_135 = arith.constant 0 : i32
    %270 = arith.cmpi ne, %269, %c0_i32_135 : i32
    scf.if %270 {
      %c0_136 = arith.constant 0 : index
      %c0_137 = arith.constant 0 : index
      %271 = vector.load %arg13[%c0_136, %c0_137] : memref<2x32xf32, #tpu.memory_space<vmem>>, vector<2x32xf32>
      %c0_138 = arith.constant 0 : index
      %c0_139 = arith.constant 0 : index
      %c0_140 = arith.constant 0 : index
      %272 = vector.load %arg9[%c0_138, %c0_139, %c0_140] : memref<1x2x32xf32, #tpu.memory_space<vmem>>, vector<1x2x32xf32>
      %273 = vector.shape_cast %272 : vector<1x2x32xf32> to vector<2x32xf32>
      %274 = vector.shape_cast %271 : vector<2x32xf32> to vector<1x2x32xf32>
      tpu.vector_store %arg9[%c0_138, %c0_139, %c0_140], %274 {strides = array<i32>} : memref<1x2x32xf32, #tpu.memory_space<vmem>>, vector<1x2x32xf32>,
      %c0_141 = arith.constant 0 : index
      %c0_142 = arith.constant 0 : index
      %275 = vector.load %arg14[%c0_141, %c0_142] : memref<2x32xf32, #tpu.memory_space<vmem>>, vector<2x32xf32>
      %c0_143 = arith.constant 0 : index
      %c0_144 = arith.constant 0 : index
      %c0_145 = arith.constant 0 : index
      %276 = vector.load %arg10[%c0_143, %c0_144, %c0_145] : memref<1x2x32xf32, #tpu.memory_space<vmem>>, vector<1x2x32xf32>
      %277 = vector.shape_cast %276 : vector<1x2x32xf32> to vector<2x32xf32>
      %278 = vector.shape_cast %275 : vector<2x32xf32> to vector<1x2x32xf32>
      tpu.vector_store %arg10[%c0_143, %c0_144, %c0_145], %278 {strides = array<i32>} : memref<1x2x32xf32, #tpu.memory_space<vmem>>, vector<1x2x32xf32>,
    } else {
    }
    return
  }
  func.func @transform_0(%arg0: i32, %arg1: i32) -> (i32, i32) {
    %c1_i32 = arith.constant 1 : i32
    %0 = arith.minsi %arg0, %c1_i32 : i32
    %c1_i32_0 = arith.constant 1 : i32
    %1 = arith.subi %c1_i32_0, %0 : i32
    %2 = arith.muli %arg1, %1 : i32
    %c0_i32 = arith.constant 0 : i32
    %c0_i32_1 = arith.constant 0 : i32
    return %2, %c0_i32 : i32, i32
  }
  func.func @transform_1(%arg0: i32, %arg1: i32) -> (i32, i32, i32) {
    %c0_i32 = arith.constant 0 : i32
    %c0_i32_0 = arith.constant 0 : i32
    %c0_i32_1 = arith.constant 0 : i32
    return %arg0, %c0_i32, %c0_i32_0 : i32, i32, i32
  }
  func.func @transform_2(%arg0: i32, %arg1: i32) -> (i32, i32, i32) {
    %c0_i32 = arith.constant 0 : i32
    %c0_i32_0 = arith.constant 0 : i32
    %c0_i32_1 = arith.constant 0 : i32
    return %arg0, %c0_i32, %c0_i32_0 : i32, i32, i32
  }
  func.func @transform_3(%arg0: i32, %arg1: i32) -> (i32, i32, i32) {
    %c0_i32 = arith.constant 0 : i32
    %c0_i32_0 = arith.constant 0 : i32
    %c0_i32_1 = arith.constant 0 : i32
    return %arg0, %c0_i32, %c0_i32_0 : i32, i32, i32
  }
  func.func @transform_4(%arg0: i32, %arg1: i32) -> (i32, i32, i32) {
    %c0_i32 = arith.constant 0 : i32
    %c0_i32_0 = arith.constant 0 : i32
    %c0_i32_1 = arith.constant 0 : i32
    return %arg0, %c0_i32, %c0_i32_0 : i32, i32, i32
  }
  func.func @transform_5(%arg0: i32, %arg1: i32) -> (i32, i32, i32) {
    %c0_i32 = arith.constant 0 : i32
    %c0_i32_0 = arith.constant 0 : i32
    %c0_i32_1 = arith.constant 0 : i32
    return %arg0, %c0_i32, %c0_i32_0 : i32, i32, i32
  }
  func.func @transform_6(%arg0: i32, %arg1: i32) -> (i32, i32) {
    %c0_i32 = arith.constant 0 : i32
    %c0_i32_0 = arith.constant 0 : i32
    return %arg1, %c0_i32 : i32, i32
  }
  func.func @transform_7(%arg0: i32, %arg1: i32) -> (i32, i32, i32) {
    %c0_i32 = arith.constant 0 : i32
    %c0_i32_0 = arith.constant 0 : i32
    %c0_i32_1 = arith.constant 0 : i32
    return %arg0, %c0_i32, %c0_i32_0 : i32, i32, i32
  }
  func.func @transform_8(%arg0: i32, %arg1: i32) -> (i32, i32, i32) {
    %c0_i32 = arith.constant 0 : i32
    %c0_i32_0 = arith.constant 0 : i32
    %c0_i32_1 = arith.constant 0 : i32
    return %arg0, %c0_i32, %c0_i32_0 : i32, i32, i32
  }
}

</mosaic_0001>

<llo_original>
// kernel: tpu_custom_call.1
$region0: #{tpu_custom_call.1}
  #allocation0 [shape = 'u32[]', space=smem, size = 0x4, offset = 0x4, fixed_abs, tag = 'smem constant byte address 0x4 - core index']
  #allocation1 [shape = 'u32[72,128]{1,0:T(1,128)}', space=vmem, size = 0x9000, scoped, tag = 'internal scratch']
  #allocation2 [shape = 'f32[16,32]{1,0:T(8,128)}', space=vmem, size = 0x2000, scoped, tag = 'scratch operand']
  #allocation3 [shape = 'f32[16,128]{1,0:T(8,128)}', space=vmem, size = 0x2000, scoped, tag = 'scratch operand']
  #allocation4 [shape = 'f32[2,32]{1,0:T(2,128)}', space=vmem, size = 0x400, scoped, tag = 'scratch operand']
  #allocation5 [shape = 'f32[2,32]{1,0:T(2,128)}', space=vmem, size = 0x400, scoped, tag = 'scratch operand']
  %s0 = inlined_call_operand.hbm [shape: f32[16,32], index: 0, kind: input, shape index: {}]
  %s1 = inlined_call_operand.hbm [shape: f32[2,2,32], index: 1, kind: input, shape index: {}]
  %s2 = inlined_call_operand.hbm [shape: f32[2,2,32], index: 2, kind: input, shape index: {}]
  %s3 = inlined_call_operand.hbm [shape: f32[2,32,128], index: 3, kind: input, shape index: {}]
  %s4 = inlined_call_operand.hbm [shape: f32[2,32,128], index: 4, kind: input, shape index: {}]
  %s5 = inlined_call_operand.vmem [shape: f32[2,1,128], index: 5, kind: input, shape index: {}]
  %s6 = inlined_call_operand.hbm [shape: f32[16,32], index: 6, kind: output, shape index: {0}]
  %s7 = inlined_call_operand.hbm [shape: f32[2,2,32], index: 7, kind: output, shape index: {1}]
  %s8 = inlined_call_operand.hbm [shape: f32[2,2,32], index: 8, kind: output, shape index: {2}]
  %9 = xla_tuple %s6, %s7, %s8
  %s10 = sld [smem:[#allocation0]]
  $region105: #{tpu_custom_call.1} parent=0
    _
  %s12 = ssub.s32 1, %s10
  %s13 = scalar_select 0, %s12, %s10
  $region1: #{tpu_custom_call.1} parent=0
    #allocation6 [shape = 'u8[16384]{0}', space=vmem, size = 0x4000, scoped, tag = 'input window, operand 0']
    #allocation7 [shape = 's32[2]{0}', space=sflag, size = 0x8, scoped, tag = 'scoped memory for tpu_custom_call.1']
    #allocation8 [shape = 's32[2]{0}', space=sflag, size = 0x8, scoped, tag = 'scoped memory for tpu_custom_call.1']
    #allocation9 [shape = 'u8[2048]{0}', space=vmem, size = 0x800, scoped, tag = 'input window, operand 1']
    #allocation10 [shape = 's32[2]{0}', space=sflag, size = 0x8, scoped, tag = 'scoped memory for tpu_custom_call.1']
    #allocation11 [shape = 'u8[2048]{0}', space=vmem, size = 0x800, scoped, tag = 'input window, operand 2']
    #allocation12 [shape = 'u8[32768]{0}', space=vmem, size = 0x8000, scoped, tag = 'input window, operand 3']
    #allocation13 [shape = 's32[2]{0}', space=sflag, size = 0x8, scoped, tag = 'scoped memory for tpu_custom_call.1']
    #allocation14 [shape = 'u8[32768]{0}', space=vmem, size = 0x8000, scoped, tag = 'input window, operand 4']
    #allocation15 [shape = 'u8[8192]{0}', space=vmem, size = 0x2000, scoped, tag = 'output window, operand 0, single buffered']
    #allocation16 [shape = 'u8[2048]{0}', space=vmem, size = 0x800, scoped, tag = 'output window, operand 1']
    #allocation17 [shape = 's32[2]{0}', space=sflag, size = 0x8, scoped, tag = 'scoped memory for tpu_custom_call.1']
    #allocation18 [shape = 'u8[2048]{0}', space=vmem, size = 0x800, scoped, tag = 'output window, operand 2']
    %14 = vsyncpa [#allocation7], 0
    %s15 = scalar_lea.sflag [#allocation7], 1
    %16 = vsyncpa %s15, 0
    %17 = vsyncpa [#allocation10], 0
    %s18 = scalar_lea.sflag [#allocation10], 1
    %19 = vsyncpa %s18, 0
    %20 = vsyncpa [#allocation13], 0
    %s21 = scalar_lea.sflag [#allocation13], 1
    %22 = vsyncpa %s21, 0
    %23 = vsyncpa [#allocation8], 0
    %24 = vsyncpa [#allocation17], 0
    %s25 = scalar_lea.sflag [#allocation17], 1
    %26 = vsyncpa %s25, 0
    loop: start=0, step=1, limit=4
    $region2: #{tpu_custom_call.1} parent=1 // loop_pre_header
      _
    $region3: #{tpu_custom_call.1} parent=1 // loop_header
      %s28 = sphi 0, %s32
      %p29 = scmp.ge.s32.totalorder %s28, 4
      %s35 = sphi 0, %s47
      %s36 = sphi 0, %s43
      %s37 = sphi 0, %s35
      %s38 = sphi 0, %s36
      %s39 = sphi 0, %s37
      %s40 = sphi 0, %s38
      %s58 = sphi 0, %s60
      %s61 = sphi 0, %s58
      %s62 = sphi 0, %s61
      %s78 = sphi 0, %s62
      %s84 = sphi 0, %s86
      %s87 = sphi 0, %s84
      %s88 = sphi 0, %s87
      %s104 = sphi 0, %s88
      %s110 = sphi 0, %s112
      %s113 = sphi 0, %s110
      %s114 = sphi 0, %s113
      %s130 = sphi 0, %s114
      %s136 = sphi 0, %s138
      %s139 = sphi 0, %s136
      %s140 = sphi 0, %s139
      %s156 = sphi 0, %s140
      %s162 = sphi 0, %s164
      %s165 = sphi 0, %s162
      %s166 = sphi 0, %s165
      %s182 = sphi 0, %s166
      %s188 = sphi 0, %s190
      %s191 = sphi 0, %s188
      %s192 = sphi 0, %s191
      %s208 = sphi 0, %s192
      %s214 = sphi 0, %s216
      %s217 = sphi 0, %s214
      %s218 = sphi 0, %s217
      %s234 = sphi 0, %s218
      %s240 = sphi 0, %s242
      %s243 = sphi 0, %s240
      %s244 = sphi 0, %s243
      %s260 = sphi 0, %s244
      %s266 = sphi 0, %s268
      %s269 = sphi 0, %s266
      %s270 = sphi 0, %s269
      %s286 = sphi 0, %s270
    $region4: #{tpu_custom_call.1} parent=1 // loop_header_branch
      %31 = sbr.rel (%p29) target = $region8
    $region5: #{tpu_custom_call.1} parent=1 // loop_body
      %s33 = ssub.s32 %s28, 1
      %s34 = ssub.s32 %s28, 2
      %s41 = sadd.s32 1, %s36
      %p42 = scmp.ge.s32.totalorder %s41, 1
      %s43 = scalar_select %p42, 0, %s41
      %s44 = sadd.s32 1, %s35
      %s45 = scalar_select %p42, %s44, %s35
      %p46 = scmp.ge.s32.totalorder %s45, 2
      %s47 = scalar_select %p46, 0, %s45
      %p48 = scmp.lt.s32.totalorder %s35, 1
      %s49 = scalar_select %p48, %s35, 1
      %s50 = ssub.s32 1, %s49
      %s51 = smul.u32 %s36, %s50
      %p52 = scmp.lt.s32.totalorder %s47, 1
      %s53 = scalar_select %p52, %s47, 1
      %s54 = ssub.s32 1, %s53
      %s55 = smul.u32 %s43, %s54
      %s56 = ssub.s32 %s51, %s55
      %p57 = scmp.eq.s32.totalorder %s56, 0
      %s59 = sadd.s32 %s58, 1
      %s60 = scalar_select %p57, %s58, %s59
      %p63 = pneg %p57
      %p64 = scmp.eq.s32.totalorder %s28, 1
      %p65 = por %p63, %p64
      %p66 = scmp.ne.s32.totalorder %s58, %s61
      %p67 = scmp.eq.s32.totalorder %s28, 0
      %p68 = por %p66, %p67
      %p69 = scmp.ne.s32.totalorder %s58, %s61
      %p70 = scmp.eq.s32.totalorder %s33, 1
      %p71 = por %p69, %p70
      %p72 = scmp.ne.s32.totalorder %s61, %s62
      %p73 = scmp.eq.s32.totalorder %s33, 0
      %p74 = por %p72, %p73
      %p75 = scmp.ne.s32.totalorder %s61, %s62
      %p76 = scmp.eq.s32.totalorder %s34, 1
      %p77 = por %p75, %p76
      %p79 = scmp.ne.s32.totalorder %s62, %s78
      %p80 = scmp.eq.s32.totalorder %s34, 0
      %p81 = por %p79, %p80
      %s82 = ssub.s32 %s35, %s47
      %p83 = scmp.eq.s32.totalorder %s82, 0
      %s85 = sadd.s32 %s84, 1
      %s86 = scalar_select %p83, %s84, %s85
      %p89 = pneg %p83
      %p90 = scmp.eq.s32.totalorder %s28, 1
      %p91 = por %p89, %p90
      %p92 = scmp.ne.s32.totalorder %s84, %s87
      %p93 = scmp.eq.s32.totalorder %s28, 0
      %p94 = por %p92, %p93
      %p95 = scmp.ne.s32.totalorder %s84, %s87
      %p96 = scmp.eq.s32.totalorder %s33, 1
      %p97 = por %p95, %p96
      %p98 = scmp.ne.s32.totalorder %s87, %s88
      %p99 = scmp.eq.s32.totalorder %s33, 0
      %p100 = por %p98, %p99
      %p101 = scmp.ne.s32.totalorder %s87, %s88
      %p102 = scmp.eq.s32.totalorder %s34, 1
      %p103 = por %p101, %p102
      %p105 = scmp.ne.s32.totalorder %s88, %s104
      %p106 = scmp.eq.s32.totalorder %s34, 0
      %p107 = por %p105, %p106
      %s108 = ssub.s32 %s35, %s47
      %p109 = scmp.eq.s32.totalorder %s108, 0
      %s111 = sadd.s32 %s110, 1
      %s112 = scalar_select %p109, %s110, %s111
      %p115 = pneg %p109
      %p116 = scmp.eq.s32.totalorder %s28, 1
      %p117 = por %p115, %p116
      %p118 = scmp.ne.s32.totalorder %s110, %s113
      %p119 = scmp.eq.s32.totalorder %s28, 0
      %p120 = por %p118, %p119
      %p121 = scmp.ne.s32.totalorder %s110, %s113
      %p122 = scmp.eq.s32.totalorder %s33, 1
      %p123 = por %p121, %p122
      %p124 = scmp.ne.s32.totalorder %s113, %s114
      %p125 = scmp.eq.s32.totalorder %s33, 0
      %p126 = por %p124, %p125
      %p127 = scmp.ne.s32.totalorder %s113, %s114
      %p128 = scmp.eq.s32.totalorder %s34, 1
      %p129 = por %p127, %p128
      %p131 = scmp.ne.s32.totalorder %s114, %s130
      %p132 = scmp.eq.s32.totalorder %s34, 0
      %p133 = por %p131, %p132
      %s134 = ssub.s32 %s35, %s47
      %p135 = scmp.eq.s32.totalorder %s134, 0
      %s137 = sadd.s32 %s136, 1
      %s138 = scalar_select %p135, %s136, %s137
      %p141 = pneg %p135
      %p142 = scmp.eq.s32.totalorder %s28, 1
      %p143 = por %p141, %p142
      %p144 = scmp.ne.s32.totalorder %s136, %s139
      %p145 = scmp.eq.s32.totalorder %s28, 0
      %p146 = por %p144, %p145
      %p147 = scmp.ne.s32.totalorder %s136, %s139
      %p148 = scmp.eq.s32.totalorder %s33, 1
      %p149 = por %p147, %p148
      %p150 = scmp.ne.s32.totalorder %s139, %s140
      %p151 = scmp.eq.s32.totalorder %s33, 0
      %p152 = por %p150, %p151
      %p153 = scmp.ne.s32.totalorder %s139, %s140
      %p154 = scmp.eq.s32.totalorder %s34, 1
      %p155 = por %p153, %p154
      %p157 = scmp.ne.s32.totalorder %s140, %s156
      %p158 = scmp.eq.s32.totalorder %s34, 0
      %p159 = por %p157, %p158
      %s160 = ssub.s32 %s35, %s47
      %p161 = scmp.eq.s32.totalorder %s160, 0
      %s163 = sadd.s32 %s162, 1
      %s164 = scalar_select %p161, %s162, %s163
      %p167 = pneg %p161
      %p168 = scmp.eq.s32.totalorder %s28, 1
      %p169 = por %p167, %p168
      %p170 = scmp.ne.s32.totalorder %s162, %s165
      %p171 = scmp.eq.s32.totalorder %s28, 0
      %p172 = por %p170, %p171
      %p173 = scmp.ne.s32.totalorder %s162, %s165
      %p174 = scmp.eq.s32.totalorder %s33, 1
      %p175 = por %p173, %p174
      %p176 = scmp.ne.s32.totalorder %s165, %s166
      %p177 = scmp.eq.s32.totalorder %s33, 0
      %p178 = por %p176, %p177
      %p179 = scmp.ne.s32.totalorder %s165, %s166
      %p180 = scmp.eq.s32.totalorder %s34, 1
      %p181 = por %p179, %p180
      %p183 = scmp.ne.s32.totalorder %s166, %s182
      %p184 = scmp.eq.s32.totalorder %s34, 0
      %p185 = por %p183, %p184
      %s186 = ssub.s32 %s35, %s47
      %p187 = scmp.eq.s32.totalorder %s186, 0
      %s189 = sadd.s32 %s188, 1
      %s190 = scalar_select %p187, %s188, %s189
      %p193 = pneg %p187
      %p194 = scmp.eq.s32.totalorder %s28, 1
      %p195 = por %p193, %p194
      %p196 = scmp.ne.s32.totalorder %s188, %s191
      %p197 = scmp.eq.s32.totalorder %s28, 0
      %p198 = por %p196, %p197
      %p199 = scmp.ne.s32.totalorder %s188, %s191
      %p200 = scmp.eq.s32.totalorder %s33, 1
      %p201 = por %p199, %p200
      %p202 = scmp.ne.s32.totalorder %s191, %s192
      %p203 = scmp.eq.s32.totalorder %s33, 0
      %p204 = por %p202, %p203
      %p205 = scmp.ne.s32.totalorder %s191, %s192
      %p206 = scmp.eq.s32.totalorder %s34, 1
      %p207 = por %p205, %p206
      %p209 = scmp.ne.s32.totalorder %s192, %s208
      %p210 = scmp.eq.s32.totalorder %s34, 0
      %p211 = por %p209, %p210
      %s212 = ssub.s32 %s36, %s43
      %p213 = scmp.eq.s32.totalorder %s212, 0
      %s215 = sadd.s32 %s214, 1
      %s216 = scalar_select %p213, %s214, %s215
      %p219 = pneg %p213
      %p220 = scmp.eq.s32.totalorder %s28, 1
      %p221 = por %p219, %p220
      %p222 = scmp.ne.s32.totalorder %s214, %s217
      %p223 = scmp.eq.s32.totalorder %s28, 0
      %p224 = por %p222, %p223
      %p225 = scmp.ne.s32.totalorder %s214, %s217
      %p226 = scmp.eq.s32.totalorder %s33, 1
      %p227 = por %p225, %p226
      %p228 = scmp.ne.s32.totalorder %s217, %s218
      %p229 = scmp.eq.s32.totalorder %s33, 0
      %p230 = por %p228, %p229
      %p231 = scmp.ne.s32.totalorder %s217, %s218
      %p232 = scmp.eq.s32.totalorder %s34, 1
      %p233 = por %p231, %p232
      %p235 = scmp.ne.s32.totalorder %s218, %s234
      %p236 = scmp.eq.s32.totalorder %s34, 0
      %p237 = por %p235, %p236
      %s238 = ssub.s32 %s35, %s47
      %p239 = scmp.eq.s32.totalorder %s238, 0
      %s241 = sadd.s32 %s240, 1
      %s242 = scalar_select %p239, %s240, %s241
      %p245 = pneg %p239
      %p246 = scmp.eq.s32.totalorder %s28, 1
      %p247 = por %p245, %p246
      %p248 = scmp.ne.s32.totalorder %s240, %s243
      %p249 = scmp.eq.s32.totalorder %s28, 0
      %p250 = por %p248, %p249
      %p251 = scmp.ne.s32.totalorder %s240, %s243
      %p252 = scmp.eq.s32.totalorder %s33, 1
      %p253 = por %p251, %p252
      %p254 = scmp.ne.s32.totalorder %s243, %s244
      %p255 = scmp.eq.s32.totalorder %s33, 0
      %p256 = por %p254, %p255
      %p257 = scmp.ne.s32.totalorder %s243, %s244
      %p258 = scmp.eq.s32.totalorder %s34, 1
      %p259 = por %p257, %p258
      %p261 = scmp.ne.s32.totalorder %s244, %s260
      %p262 = scmp.eq.s32.totalorder %s34, 0
      %p263 = por %p261, %p262
      %s264 = ssub.s32 %s35, %s47
      %p265 = scmp.eq.s32.totalorder %s264, 0
      %s267 = sadd.s32 %s266, 1
      %s268 = scalar_select %p265, %s266, %s267
      %p271 = pneg %p265
      %p272 = scmp.eq.s32.totalorder %s28, 1
      %p273 = por %p271, %p272
      %p274 = scmp.ne.s32.totalorder %s266, %s269
      %p275 = scmp.eq.s32.totalorder %s28, 0
      %p276 = por %p274, %p275
      %p277 = scmp.ne.s32.totalorder %s266, %s269
      %p278 = scmp.eq.s32.totalorder %s33, 1
      %p279 = por %p277, %p278
      %p280 = scmp.ne.s32.totalorder %s269, %s270
      %p281 = scmp.eq.s32.totalorder %s33, 0
      %p282 = por %p280, %p281
      %p283 = scmp.ne.s32.totalorder %s269, %s270
      %p284 = scmp.eq.s32.totalorder %s34, 1
      %p285 = por %p283, %p284
      %p287 = scmp.ne.s32.totalorder %s270, %s286
      %p288 = scmp.eq.s32.totalorder %s34, 0
      %p289 = por %p287, %p288
      %p290 = scmp.le.s32.totalorder 1, %s28
      %p291 = scmp.lt.s32.totalorder %s28, 3
      %p292 = pnand %p290, %p291
      %p293 = pneg %p292
      // Predicated region
      $region9: #{tpu_custom_call.1} parent=5 // pred_check
        _
      $region10: #{tpu_custom_call.1} parent=5 // pred_check_branch
        %295 = sbr.rel (%p292) target = $region12
      $region11: #{tpu_custom_call.1} parent=5 // pred_region
        %s296 = ssub.s32 %s28, 1
      $region12: #{tpu_custom_call.1} parent=5 // pred_fallthru
        _
      %p297 = scmp.lt.s32.totalorder %s28, 2
      // Predicated region
      $region13: #{tpu_custom_call.1} parent=5 // pred_check
        %p298 = pneg %p297
      $region14: #{tpu_custom_call.1} parent=5 // pred_check_branch
        %300 = sbr.rel (%p298) target = $region16
      $region15: #{tpu_custom_call.1} parent=5 // pred_region
        // Predicated region
        $region17: #{tpu_custom_call.1} parent=15 // pred_check
          %p301 = pneg %p68
        $region18: #{tpu_custom_call.1} parent=15 // pred_check_branch
          %303 = sbr.rel (%p301) target = $region20
        $region19: #{tpu_custom_call.1} parent=15 // pred_region
          %s304 = sand.u32 %s58, 1
          %s305 = scalar_lea.sflag [#allocation7], %s304
          %s306 = sand.u32 %s58, 1
          %s307 = smul.addr %s306, 16
          %s308 = scalar_lea.vmem [#allocation6], %s307
          %p309 = scmp.lt.s32.totalorder %s35, 1
          %s310 = scalar_select %p309, %s35, 1
          %s311 = ssub.s32 1, %s310
          %s312 = smul.u32 %s36, %s311
          %s313 = smul.u32 2, %s312
          %315 = vsyncadd %s305, 0
          %s316 = smul.addr %s313, 8
          %s317 = scalar_lea.hbm %s0, %s316
          %s318 = sshll.u32 %s317, 4
          %s319 = int_to_ptr.hbm [resolvable:$true] %s318
          %s320 = sshll.u32 %s308, 4
          %s321 = int_to_ptr.vmem [resolvable:$true] %s320
          %326 = dma.hbm_to_vmem [thread:$0]  %s319, 256, %s321, %s305, 128, 128, 8
        $region20: #{tpu_custom_call.1} parent=15 // pred_fallthru
          _
        // Predicated region
        $region21: #{tpu_custom_call.1} parent=15 // pred_check
          %p327 = pneg %p94
        $region22: #{tpu_custom_call.1} parent=15 // pred_check_branch
          %329 = sbr.rel (%p327) target = $region24
        $region23: #{tpu_custom_call.1} parent=15 // pred_region
          %s330 = sand.u32 %s28, 1
          %s331 = scalar_lea.sflag [#allocation10], %s330
          %s332 = sand.u32 %s84, 1
          %s333 = smul.addr %s332, 2
          %s334 = scalar_lea.vmem [#allocation9], %s333
          %336 = vsyncadd %s331, 0
          %s337 = smul.addr %s35, 2
          %s338 = scalar_lea.hbm %s1, %s337
          %s340 = sshll.u32 %s338, 4
          %s341 = int_to_ptr.hbm [resolvable:$true] %s340
          %s342 = sshll.u32 %s334, 4
          %s343 = int_to_ptr.vmem [resolvable:$true] %s342
          %345 = dma.hbm_to_vmem [thread:$0]  %s341, 32, %s343, %s331
        $region24: #{tpu_custom_call.1} parent=15 // pred_fallthru
          _
        // Predicated region
        $region25: #{tpu_custom_call.1} parent=15 // pred_check
          %p346 = pneg %p120
        $region26: #{tpu_custom_call.1} parent=15 // pred_check_branch
          %348 = sbr.rel (%p346) target = $region28
        $region27: #{tpu_custom_call.1} parent=15 // pred_region
          %s349 = sand.u32 %s28, 1
          %s350 = scalar_lea.sflag [#allocation10], %s349
          %s351 = sand.u32 %s110, 1
          %s352 = smul.addr %s351, 2
          %s353 = scalar_lea.vmem [#allocation11], %s352
          %355 = vsyncadd %s350, 0
          %s356 = smul.addr %s35, 2
          %s357 = scalar_lea.hbm %s2, %s356
          %s359 = sshll.u32 %s357, 4
          %s360 = int_to_ptr.hbm [resolvable:$true] %s359
          %s361 = sshll.u32 %s353, 4
          %s362 = int_to_ptr.vmem [resolvable:$true] %s361
          %364 = dma.hbm_to_vmem [thread:$0]  %s360, 32, %s362, %s350
        $region28: #{tpu_custom_call.1} parent=15 // pred_fallthru
          _
        // Predicated region
        $region29: #{tpu_custom_call.1} parent=15 // pred_check
          %p365 = pneg %p146
        $region30: #{tpu_custom_call.1} parent=15 // pred_check_branch
          %367 = sbr.rel (%p365) target = $region32
        $region31: #{tpu_custom_call.1} parent=15 // pred_region
          %s368 = sand.u32 %s28, 1
          %s369 = scalar_lea.sflag [#allocation13], %s368
          %s370 = sand.u32 %s136, 1
          %s371 = smul.addr %s370, 32
          %s372 = scalar_lea.vmem [#allocation12], %s371
          %374 = vsyncadd %s369, 0
          %s375 = smul.addr %s35, 4
          %s376 = smul.addr %s375, 8
          %s377 = scalar_lea.hbm %s3, %s376
          %s378 = sshll.u32 %s377, 4
          %s379 = int_to_ptr.hbm [resolvable:$true] %s378
          %s380 = sshll.u32 %s372, 4
          %s381 = int_to_ptr.vmem [resolvable:$true] %s380
          %386 = dma.hbm_to_vmem [thread:$0]  %s379, 512, %s381, %s369, 128, 128, 8
        $region32: #{tpu_custom_call.1} parent=15 // pred_fallthru
          _
        // Predicated region
        $region33: #{tpu_custom_call.1} parent=15 // pred_check
          %p387 = pneg %p172
        $region34: #{tpu_custom_call.1} parent=15 // pred_check_branch
          %389 = sbr.rel (%p387) target = $region36
        $region35: #{tpu_custom_call.1} parent=15 // pred_region
          %s390 = sand.u32 %s28, 1
          %s391 = scalar_lea.sflag [#allocation13], %s390
          %s392 = sand.u32 %s162, 1
          %s393 = smul.addr %s392, 32
          %s394 = scalar_lea.vmem [#allocation14], %s393
          %396 = vsyncadd %s391, 0
          %s397 = smul.addr %s35, 4
          %s398 = smul.addr %s397, 8
          %s399 = scalar_lea.hbm %s4, %s398
          %s400 = sshll.u32 %s399, 4
          %s401 = int_to_ptr.hbm [resolvable:$true] %s400
          %s402 = sshll.u32 %s394, 4
          %s403 = int_to_ptr.vmem [resolvable:$true] %s402
          %408 = dma.hbm_to_vmem [thread:$0]  %s401, 512, %s403, %s391, 128, 128, 8
        $region36: #{tpu_custom_call.1} parent=15 // pred_fallthru
          _
        // Predicated region
        $region37: #{tpu_custom_call.1} parent=15 // pred_check
          %p409 = pneg %p198
        $region38: #{tpu_custom_call.1} parent=15 // pred_check_branch
          %411 = sbr.rel (%p409) target = $region40
        $region39: #{tpu_custom_call.1} parent=15 // pred_region
          %p412 = scmp.lt.s32.totalorder %s35, 1
          %s413 = scalar_select %p412, %s35, 1
          %s414 = scalar_lea.vmem %s5, %s413
        $region40: #{tpu_custom_call.1} parent=15 // pred_fallthru
          _
      $region16: #{tpu_custom_call.1} parent=5 // pred_fallthru
        _
      %p415 = scmp.le.s32.totalorder 1, %s28
      %p416 = scmp.lt.s32.totalorder %s28, 3
      %p417 = pnand %p415, %p416
      %p418 = pneg %p417
      // Predicated region
      $region41: #{tpu_custom_call.1} parent=5 // pred_check
        _
      $region42: #{tpu_custom_call.1} parent=5 // pred_check_branch
        %420 = sbr.rel (%p417) target = $region44
      $region43: #{tpu_custom_call.1} parent=5 // pred_region
        %s421 = ssub.s32 %s28, 1
        %s422 = sand.u32 %s61, 1
        %s423 = scalar_lea.sflag [#allocation7], %s422
        %s424 = sand.u32 %s61, 1
        %s425 = smul.addr %s424, 16
        %s426 = scalar_lea.vmem [#allocation6], %s425
        // Predicated region
        $region45: #{tpu_custom_call.1} parent=43 // pred_check
          %p427 = pneg %p74
        $region46: #{tpu_custom_call.1} parent=43 // pred_check_branch
          %429 = sbr.rel (%p427) target = $region48
        $region47: #{tpu_custom_call.1} parent=43 // pred_region
          %431 = dma.done %s423, 256
        $region48: #{tpu_custom_call.1} parent=43 // pred_fallthru
          _
        %s432 = sand.u32 %s33, 1
        %s433 = scalar_lea.sflag [#allocation10], %s432
        %s434 = sand.u32 %s87, 1
        %s435 = smul.addr %s434, 2
        %s436 = scalar_lea.vmem [#allocation9], %s435
        // Predicated region
        $region49: #{tpu_custom_call.1} parent=43 // pred_check
          %p437 = pneg %p100
        $region50: #{tpu_custom_call.1} parent=43 // pred_check_branch
          %439 = sbr.rel (%p437) target = $region52
        $region51: #{tpu_custom_call.1} parent=43 // pred_region
          %441 = dma.done %s433, 32
        $region52: #{tpu_custom_call.1} parent=43 // pred_fallthru
          _
        %s442 = sand.u32 %s33, 1
        %s443 = scalar_lea.sflag [#allocation10], %s442
        %s444 = sand.u32 %s113, 1
        %s445 = smul.addr %s444, 2
        %s446 = scalar_lea.vmem [#allocation11], %s445
        // Predicated region
        $region53: #{tpu_custom_call.1} parent=43 // pred_check
          %p447 = pneg %p126
        $region54: #{tpu_custom_call.1} parent=43 // pred_check_branch
          %449 = sbr.rel (%p447) target = $region56
        $region55: #{tpu_custom_call.1} parent=43 // pred_region
          %451 = dma.done %s443, 32
        $region56: #{tpu_custom_call.1} parent=43 // pred_fallthru
          _
        %s452 = sand.u32 %s33, 1
        %s453 = scalar_lea.sflag [#allocation13], %s452
        %s454 = sand.u32 %s139, 1
        %s455 = smul.addr %s454, 32
        %s456 = scalar_lea.vmem [#allocation12], %s455
        // Predicated region
        $region57: #{tpu_custom_call.1} parent=43 // pred_check
          %p457 = pneg %p152
        $region58: #{tpu_custom_call.1} parent=43 // pred_check_branch
          %459 = sbr.rel (%p457) target = $region60
        $region59: #{tpu_custom_call.1} parent=43 // pred_region
          %461 = dma.done %s453, 512
        $region60: #{tpu_custom_call.1} parent=43 // pred_fallthru
          _
        %s462 = sand.u32 %s33, 1
        %s463 = scalar_lea.sflag [#allocation13], %s462
        %s464 = sand.u32 %s165, 1
        %s465 = smul.addr %s464, 32
        %s466 = scalar_lea.vmem [#allocation14], %s465
        // Predicated region
        $region61: #{tpu_custom_call.1} parent=43 // pred_check
          %p467 = pneg %p178
        $region62: #{tpu_custom_call.1} parent=43 // pred_check_branch
          %469 = sbr.rel (%p467) target = $region64
        $region63: #{tpu_custom_call.1} parent=43 // pred_region
          %471 = dma.done %s463, 512
        $region64: #{tpu_custom_call.1} parent=43 // pred_fallthru
          _
        %s472 = sand.u32 %s61, 1
        %s473 = scalar_lea.sflag [#allocation7], %s472
        %s474 = sand.u32 %s61, 1
        %s475 = smul.addr %s474, 16
        %s476 = scalar_lea.vmem [#allocation6], %s475
        %p477 = pneg %p74
        %p478 = pneg %p71
        %s479 = sand.u32 %s33, 1
        %s480 = scalar_lea.sflag [#allocation10], %s479
        %s481 = sand.u32 %s87, 1
        %s482 = smul.addr %s481, 2
        %s483 = scalar_lea.vmem [#allocation9], %s482
        %p484 = pneg %p100
        %p485 = pneg %p97
        %s486 = sand.u32 %s33, 1
        %s487 = scalar_lea.sflag [#allocation10], %s486
        %s488 = sand.u32 %s113, 1
        %s489 = smul.addr %s488, 2
        %s490 = scalar_lea.vmem [#allocation11], %s489
        %p491 = pneg %p126
        %p492 = pneg %p123
        %s493 = sand.u32 %s33, 1
        %s494 = scalar_lea.sflag [#allocation13], %s493
        %s495 = sand.u32 %s139, 1
        %s496 = smul.addr %s495, 32
        %s497 = scalar_lea.vmem [#allocation12], %s496
        %p498 = pneg %p152
        %p499 = pneg %p149
        %s500 = sand.u32 %s33, 1
        %s501 = scalar_lea.sflag [#allocation13], %s500
        %s502 = sand.u32 %s165, 1
        %s503 = smul.addr %s502, 32
        %s504 = scalar_lea.vmem [#allocation14], %s503
        %p505 = pneg %p178
        %p506 = pneg %p175
        %p507 = scmp.lt.s32.totalorder %s37, 1
        %s508 = scalar_select %p507, %s37, 1
        %s509 = scalar_lea.vmem %s5, %s508
        %p510 = pneg %p204
        %p511 = pneg %p201
        %p512 = pneg %p230
        %p513 = pneg %p227
        %p514 = pneg %p256
        %p515 = pneg %p253
        %s516 = sand.u32 %s33, 1
        %s517 = scalar_lea.sflag [#allocation17], %s516
        %s518 = sand.u32 %s243, 1
        %s519 = smul.addr %s518, 2
        %s520 = scalar_lea.vmem [#allocation16], %s519
        %p521 = pneg %p282
        %p522 = pneg %p279
        %s523 = sand.u32 %s33, 1
        %s524 = scalar_lea.sflag [#allocation17], %s523
        %s525 = sand.u32 %s269, 1
        %s526 = smul.addr %s525, 2
        %s527 = scalar_lea.vmem [#allocation18], %s526
        %p528 = scmp.lt.s32.totalorder %s37, 1
        %s529 = scalar_select %p528, %s37, 1
        %s530 = ssub.s32 1, %s529
        %s531 = smul.u32 %s38, %s530
        %s532 = smul.u32 2, %s531
        %p533 = scmp.lt.s32.totalorder %s37, 1
        %s534 = scalar_select %p533, %s37, 1
        %s535 = scalar_lea.vmem %s5, %s534
        %s536 = smul.u32 2, %s38
        %p537 = scmp.eq.s32.totalorder %s37, 0
        %p538 = scmp.eq.s32.totalorder %s38, 0
        %p539 = pnand %p537, %p538
        %p540 = pneg %p539
        // Predicated region
        $region65: #{tpu_custom_call.1} parent=43 // pred_check
          _
        $region66: #{tpu_custom_call.1} parent=43 // pred_check_branch
          %542 = sbr.rel (%p539) target = $region68
        $region67: #{tpu_custom_call.1} parent=43 // pred_region
          %vm543 = vcmask 261120
          %544 = vst.msk [vmem:[#allocation2] sm:$0xff] %vm543, 0.0
          %545 = vst.msk [vmem:[#allocation2 + $0x8] sm:$0xff] %vm543, 0.0
        $region68: #{tpu_custom_call.1} parent=43 // pred_fallthru
          _
        // Predicated region
        $region69: #{tpu_custom_call.1} parent=43 // pred_check
          %p546 = pneg %p538
        $region70: #{tpu_custom_call.1} parent=43 // pred_check_branch
          %548 = sbr.rel (%p546) target = $region72
        $region71: #{tpu_custom_call.1} parent=43 // pred_region
          %v549 = vld [vmem:[%s436] sm:$0x3]
          %vm550 = vcmask 254976
          %551 = vst.msk [vmem:[#allocation4] sm:$0x3] %vm550, %v549
          %v552 = vld [vmem:[%s446] sm:$0x3]
          %553 = vst.msk [vmem:[#allocation5] sm:$0x3] %vm550, %v552
        $region72: #{tpu_custom_call.1} parent=43 // pred_fallthru
          _
        %v554 = vld [vmem:[%s456] sm:$0xff]
        %v555 = vld [vmem:[%s456 + $0x8] sm:$0xff]
        %v556 = vld [vmem:[%s456 + $0x10] sm:$0xff]
        %v557 = vld [vmem:[%s456 + $0x18] sm:$0xff]
        %v558 = vld [vmem:[%s466] sm:$0xff]
        %v559 = vld [vmem:[%s466 + $0x8] sm:$0xff]
        %v560 = vld [vmem:[%s466 + $0x10] sm:$0xff]
        %v561 = vld [vmem:[%s466 + $0x18] sm:$0xff]
        %v562 = vld [vmem:[%s535] sm:$0x1]
        %s563 = smul.u32 %s38, 16
        %v564 = vld [vmem:[%s426] sm:$0xff]
        %v565 = vld [vmem:[%s426 + $0x8] sm:$0xff]
        %s566 = scalar_lea.vmem [#allocation2], %s563
        %v567 = vld [vmem:[%s566] sm:$0xff]
        %v568 = vld [vmem:[%s566 + $0x8] sm:$0xff]
        %s569 = scalar_select %p537, 1, 0
        %v570 = vstv %s569
        %vm571 = vcmp.eq.s32.totalorder %v570, 1
        %v572 = vsel %vm571, %v564, %v567
        %v573 = vsel %vm571, %v565, %v568
        %v575 = vperm.slane %v562, 0
        %vm577 = vcmask 261120
        %v579 = vsel %vm577, %v572, 0
        %v582 = vsel %vm577, %v573, 0
        %584 = vmatpush.msra.mxu0 0.0
        %585 = vmatpush.msra.mxu0 0.0
        %586 = vmatpush.msra.mxu0 0.0
        %587 = vmatpush.msra.mxu0 0.0
        %588 = vmatpush.msra.mxu0 0.0
        %589 = vmatpush.msra.mxu0 0.0
        %590 = vmatpush.msra.mxu0 0.0
        %591 = vmatpush.msra.mxu0 0.0
        %592 = vmatpush.msra.mxu0 0.0
        %593 = vmatpush.msra.mxu0 0.0
        %594 = vmatpush.msra.mxu0 0.0
        %595 = vmatpush.msra.mxu0 0.0
        %596 = vmatpush.msra.mxu0 %v557
        %597 = vmatpush.msra.mxu0 %v556
        %598 = vmatpush.msra.mxu0 %v555
        %599 = vmatpush.msra.mxu0 %v554
        %600 = vmatmul.f32.gmra.mxu0 %v579
        %v601 = vpop.f32.mrf.mxu0
        %v602 = vadd.f32 %v575, %v601
        %603 = vmatmul.f32.gmra.mxu0 %v582
        %v604 = vpop.f32.mrf.mxu0
        %v605 = vadd.f32 %v575, %v604
        %606 = vdwg.mxu0
        %607 = vst [vmem:[#allocation3] sm:$0xff] %v602
        %608 = vst [vmem:[#allocation3 + $0x8] sm:$0xff] %v605
        %v609 = vld [vmem:[#allocation3] sm:$0x3]
        %v610 = vld [vmem:[#allocation4] sm:$0x3]
        %v612 = vsel %vm577, %v610, 0
        %614 = vmatpush.msra.mxu0 0.0
        %615 = vmatpush.msra.mxu0 0.0
        %616 = vmatpush.msra.mxu0 0.0
        %617 = vmatpush.msra.mxu0 0.0
        %618 = vmatpush.msra.mxu0 0.0
        %619 = vmatpush.msra.mxu0 0.0
        %620 = vmatpush.msra.mxu0 0.0
        %621 = vmatpush.msra.mxu0 0.0
        %622 = vmatpush.msra.mxu0 0.0
        %623 = vmatpush.msra.mxu0 0.0
        %624 = vmatpush.msra.mxu0 0.0
        %625 = vmatpush.msra.mxu0 0.0
        %626 = vmatpush.msra.mxu0 %v561
        %627 = vmatpush.msra.mxu0 %v560
        %628 = vmatpush.msra.mxu0 %v559
        %629 = vmatpush.msra.mxu0 %v558
        %630 = vmatmul.f32.gmra.mxu0 %v612
        %v631 = vpop.f32.mrf.mxu0
        %v632 = vadd.f32 0.0, %v631
        %633 = vdwg.mxu0
        %v634 = vadd.f32 %v609, %v632
        %v635 = vxor.u32 %v634, 2147483648
        %v636 = vmul.f32 %v635, 1.442695
        %v637 = vpow.pop %v636
        %v638 = vadd.f32 %v637, 1.0
        %v639 = vrcp.pop %v638
        %v640 = vmul.f32 %v638, %v639
        %v641 = vsub.f32 1.0, %v640
        %v642 = vmul.f32 %v639, %v641
        %v643 = vadd.f32 %v639, %v642
        %vm644 = vweird.f32 %v638
        %vm645 = vweird.f32 %v639
        %vm646 = vmor %vm644, %vm645
        %v647 = vsel %vm646, %v639, %v643
        %v648 = vand.u32 2147483647, %v638
        %vm649 = vcmp.eq.f32.partialorder %v648, 8.507059e+37
        %v650 = vand.u32 %v638, 2147483648
        %v651 = vor.u32 1.1754944e-38, %v650
        %v652 = vsel %vm649, %v651, %v647
        %v653 = vmul.f32 1.0, %v652
        %v654 = vtanh.pop %v634
        %v655 = vld [vmem:[#allocation5] sm:$0x3]
        %657 = vrot.lane.b32.xlu0 %v655, 32
        %v658 = vpop.permute.xlu0 %657
        %v660 = vmul.f32 %v653, %v658
        %662 = vrot.lane.b32.xlu0 %v654, 64
        %v663 = vpop.permute.xlu0 %662
        %v665 = vmul.f32 %v653, %v663
        %667 = vrot.lane.b32.xlu0 %v665, 32
        %v668 = vpop.permute.xlu0 %667
        %v670 = vadd.f32 %v660, %v668
        %v671 = vtanh.pop %v670
        %673 = vrot.lane.b32.xlu0 %v671, 64
        %v674 = vpop.permute.xlu0 %673
        %v676 = vmul.f32 %v653, %v674
        %678 = vrot.lane.b32.xlu0 %v670, 96
        %v679 = vpop.permute.xlu0 %678
        %vm681 = vcmask 254976
        %682 = vst.msk [vmem:[#allocation5] sm:$0x3] %vm681, %v679
        %684 = vrot.lane.b32.xlu0 %v676, 32
        %v685 = vpop.permute.xlu0 %684
        %687 = vst.msk [vmem:[#allocation4] sm:$0x3] %vm681, %v685
        %s688 = scalar_lea.vmem [#allocation2], %s563
        %689 = vst.msk [vmem:[%s688] sm:$0x3] %vm681, %v685
        %s690 = scalar_lea.vmem [#allocation3], 2
        %v691 = vld [vmem:[%s690] sm:$0x3]
        %v692 = vld [vmem:[#allocation4] sm:$0x3]
        %v694 = vsel %vm577, %v692, 0
        %696 = vmatpush.msra.mxu0 0.0
        %697 = vmatpush.msra.mxu0 0.0
        %698 = vmatpush.msra.mxu0 0.0
        %699 = vmatpush.msra.mxu0 0.0
        %700 = vmatpush.msra.mxu0 0.0
        %701 = vmatpush.msra.mxu0 0.0
        %702 = vmatpush.msra.mxu0 0.0
        %703 = vmatpush.msra.mxu0 0.0
        %704 = vmatpush.msra.mxu0 0.0
        %705 = vmatpush.msra.mxu0 0.0
        %706 = vmatpush.msra.mxu0 0.0
        %707 = vmatpush.msra.mxu0 0.0
        %708 = vmatpush.msra.mxu0 %v561
        %709 = vmatpush.msra.mxu0 %v560
        %710 = vmatpush.msra.mxu0 %v559
        %711 = vmatpush.msra.mxu0 %v558
        %712 = vmatmul.f32.gmra.mxu0 %v694
        %v713 = vpop.f32.mrf.mxu0
        %v714 = vadd.f32 0.0, %v713
        %715 = vdwg.mxu0
        %v716 = vadd.f32 %v691, %v714
        %v717 = vxor.u32 %v716, 2147483648
        %v718 = vmul.f32 %v717, 1.442695
        %v719 = vpow.pop %v718
        %v720 = vadd.f32 %v719, 1.0
        %v721 = vrcp.pop %v720
        %v722 = vmul.f32 %v720, %v721
        %v723 = vsub.f32 1.0, %v722
        %v724 = vmul.f32 %v721, %v723
        %v725 = vadd.f32 %v721, %v724
        %vm726 = vweird.f32 %v720
        %vm727 = vweird.f32 %v721
        %vm728 = vmor %vm726, %vm727
        %v729 = vsel %vm728, %v721, %v725
        %v730 = vand.u32 2147483647, %v720
        %vm731 = vcmp.eq.f32.partialorder %v730, 8.507059e+37
        %v732 = vand.u32 %v720, 2147483648
        %v733 = vor.u32 1.1754944e-38, %v732
        %v734 = vsel %vm731, %v733, %v729
        %v735 = vmul.f32 1.0, %v734
        %v736 = vtanh.pop %v716
        %v737 = vld [vmem:[#allocation5] sm:$0x3]
        %739 = vrot.lane.b32.xlu0 %v737, 32
        %v740 = vpop.permute.xlu0 %739
        %v742 = vmul.f32 %v735, %v740
        %744 = vrot.lane.b32.xlu0 %v736, 64
        %v745 = vpop.permute.xlu0 %744
        %v747 = vmul.f32 %v735, %v745
        %749 = vrot.lane.b32.xlu0 %v747, 32
        %v750 = vpop.permute.xlu0 %749
        %v752 = vadd.f32 %v742, %v750
        %v753 = vtanh.pop %v752
        %755 = vrot.lane.b32.xlu0 %v753, 64
        %v756 = vpop.permute.xlu0 %755
        %v758 = vmul.f32 %v735, %v756
        %760 = vrot.lane.b32.xlu0 %v752, 96
        %v761 = vpop.permute.xlu0 %760
        %763 = vst.msk [vmem:[#allocation5] sm:$0x3] %vm681, %v761
        %765 = vrot.lane.b32.xlu0 %v758, 32
        %v766 = vpop.permute.xlu0 %765
        %768 = vst.msk [vmem:[#allocation4] sm:$0x3] %vm681, %v766
        %s769 = sadd.s32 %s563, 2
        %s770 = scalar_lea.vmem [#allocation2], %s769
        %771 = vst.msk [vmem:[%s770] sm:$0x3] %vm681, %v766
        %s772 = scalar_lea.vmem [#allocation3], 4
        %v773 = vld [vmem:[%s772] sm:$0x3]
        %v774 = vld [vmem:[#allocation4] sm:$0x3]
        %v776 = vsel %vm577, %v774, 0
        %778 = vmatpush.msra.mxu0 0.0
        %779 = vmatpush.msra.mxu0 0.0
        %780 = vmatpush.msra.mxu0 0.0
        %781 = vmatpush.msra.mxu0 0.0
        %782 = vmatpush.msra.mxu0 0.0
        %783 = vmatpush.msra.mxu0 0.0
        %784 = vmatpush.msra.mxu0 0.0
        %785 = vmatpush.msra.mxu0 0.0
        %786 = vmatpush.msra.mxu0 0.0
        %787 = vmatpush.msra.mxu0 0.0
        %788 = vmatpush.msra.mxu0 0.0
        %789 = vmatpush.msra.mxu0 0.0
        %790 = vmatpush.msra.mxu0 %v561
        %791 = vmatpush.msra.mxu0 %v560
        %792 = vmatpush.msra.mxu0 %v559
        %793 = vmatpush.msra.mxu0 %v558
        %794 = vmatmul.f32.gmra.mxu0 %v776
        %v795 = vpop.f32.mrf.mxu0
        %v796 = vadd.f32 0.0, %v795
        %797 = vdwg.mxu0
        %v798 = vadd.f32 %v773, %v796
        %v799 = vxor.u32 %v798, 2147483648
        %v800 = vmul.f32 %v799, 1.442695
        %v801 = vpow.pop %v800
        %v802 = vadd.f32 %v801, 1.0
        %v803 = vrcp.pop %v802
        %v804 = vmul.f32 %v802, %v803
        %v805 = vsub.f32 1.0, %v804
        %v806 = vmul.f32 %v803, %v805
        %v807 = vadd.f32 %v803, %v806
        %vm808 = vweird.f32 %v802
        %vm809 = vweird.f32 %v803
        %vm810 = vmor %vm808, %vm809
        %v811 = vsel %vm810, %v803, %v807
        %v812 = vand.u32 2147483647, %v802
        %vm813 = vcmp.eq.f32.partialorder %v812, 8.507059e+37
        %v814 = vand.u32 %v802, 2147483648
        %v815 = vor.u32 1.1754944e-38, %v814
        %v816 = vsel %vm813, %v815, %v811
        %v817 = vmul.f32 1.0, %v816
        %v818 = vtanh.pop %v798
        %v819 = vld [vmem:[#allocation5] sm:$0x3]
        %821 = vrot.lane.b32.xlu0 %v819, 32
        %v822 = vpop.permute.xlu0 %821
        %v824 = vmul.f32 %v817, %v822
        %826 = vrot.lane.b32.xlu0 %v818, 64
        %v827 = vpop.permute.xlu0 %826
        %v829 = vmul.f32 %v817, %v827
        %831 = vrot.lane.b32.xlu0 %v829, 32
        %v832 = vpop.permute.xlu0 %831
        %v834 = vadd.f32 %v824, %v832
        %v835 = vtanh.pop %v834
        %837 = vrot.lane.b32.xlu0 %v835, 64
        %v838 = vpop.permute.xlu0 %837
        %v840 = vmul.f32 %v817, %v838
        %842 = vrot.lane.b32.xlu0 %v834, 96
        %v843 = vpop.permute.xlu0 %842
        %845 = vst.msk [vmem:[#allocation5] sm:$0x3] %vm681, %v843
        %847 = vrot.lane.b32.xlu0 %v840, 32
        %v848 = vpop.permute.xlu0 %847
        %850 = vst.msk [vmem:[#allocation4] sm:$0x3] %vm681, %v848
        %s851 = sadd.s32 %s563, 4
        %s852 = scalar_lea.vmem [#allocation2], %s851
        %853 = vst.msk [vmem:[%s852] sm:$0x3] %vm681, %v848
        %s854 = scalar_lea.vmem [#allocation3], 6
        %v855 = vld [vmem:[%s854] sm:$0x3]
        %v856 = vld [vmem:[#allocation4] sm:$0x3]
        %v858 = vsel %vm577, %v856, 0
        %860 = vmatpush.msra.mxu0 0.0
        %861 = vmatpush.msra.mxu0 0.0
        %862 = vmatpush.msra.mxu0 0.0
        %863 = vmatpush.msra.mxu0 0.0
        %864 = vmatpush.msra.mxu0 0.0
        %865 = vmatpush.msra.mxu0 0.0
        %866 = vmatpush.msra.mxu0 0.0
        %867 = vmatpush.msra.mxu0 0.0
        %868 = vmatpush.msra.mxu0 0.0
        %869 = vmatpush.msra.mxu0 0.0
        %870 = vmatpush.msra.mxu0 0.0
        %871 = vmatpush.msra.mxu0 0.0
        %872 = vmatpush.msra.mxu0 %v561
        %873 = vmatpush.msra.mxu0 %v560
        %874 = vmatpush.msra.mxu0 %v559
        %875 = vmatpush.msra.mxu0 %v558
        %876 = vmatmul.f32.gmra.mxu0 %v858
        %v877 = vpop.f32.mrf.mxu0
        %v878 = vadd.f32 0.0, %v877
        %879 = vdwg.mxu0
        %v880 = vadd.f32 %v855, %v878
        %v881 = vxor.u32 %v880, 2147483648
        %v882 = vmul.f32 %v881, 1.442695
        %v883 = vpow.pop %v882
        %v884 = vadd.f32 %v883, 1.0
        %v885 = vrcp.pop %v884
        %v886 = vmul.f32 %v884, %v885
        %v887 = vsub.f32 1.0, %v886
        %v888 = vmul.f32 %v885, %v887
        %v889 = vadd.f32 %v885, %v888
        %vm890 = vweird.f32 %v884
        %vm891 = vweird.f32 %v885
        %vm892 = vmor %vm890, %vm891
        %v893 = vsel %vm892, %v885, %v889
        %v894 = vand.u32 2147483647, %v884
        %vm895 = vcmp.eq.f32.partialorder %v894, 8.507059e+37
        %v896 = vand.u32 %v884, 2147483648
        %v897 = vor.u32 1.1754944e-38, %v896
        %v898 = vsel %vm895, %v897, %v893
        %v899 = vmul.f32 1.0, %v898
        %v900 = vtanh.pop %v880
        %v901 = vld [vmem:[#allocation5] sm:$0x3]
        %903 = vrot.lane.b32.xlu0 %v901, 32
        %v904 = vpop.permute.xlu0 %903
        %v906 = vmul.f32 %v899, %v904
        %908 = vrot.lane.b32.xlu0 %v900, 64
        %v909 = vpop.permute.xlu0 %908
        %v911 = vmul.f32 %v899, %v909
        %913 = vrot.lane.b32.xlu0 %v911, 32
        %v914 = vpop.permute.xlu0 %913
        %v916 = vadd.f32 %v906, %v914
        %v917 = vtanh.pop %v916
        %919 = vrot.lane.b32.xlu0 %v917, 64
        %v920 = vpop.permute.xlu0 %919
        %v922 = vmul.f32 %v899, %v920
        %924 = vrot.lane.b32.xlu0 %v916, 96
        %v925 = vpop.permute.xlu0 %924
        %927 = vst.msk [vmem:[#allocation5] sm:$0x3] %vm681, %v925
        %929 = vrot.lane.b32.xlu0 %v922, 32
        %v930 = vpop.permute.xlu0 %929
        %932 = vst.msk [vmem:[#allocation4] sm:$0x3] %vm681, %v930
        %s933 = sadd.s32 %s563, 6
        %s934 = scalar_lea.vmem [#allocation2], %s933
        %935 = vst.msk [vmem:[%s934] sm:$0x3] %vm681, %v930
        %s936 = scalar_lea.vmem [#allocation3], 8
        %v937 = vld [vmem:[%s936] sm:$0x3]
        %v938 = vld [vmem:[#allocation4] sm:$0x3]
        %v940 = vsel %vm577, %v938, 0
        %942 = vmatpush.msra.mxu0 0.0
        %943 = vmatpush.msra.mxu0 0.0
        %944 = vmatpush.msra.mxu0 0.0
        %945 = vmatpush.msra.mxu0 0.0
        %946 = vmatpush.msra.mxu0 0.0
        %947 = vmatpush.msra.mxu0 0.0
        %948 = vmatpush.msra.mxu0 0.0
        %949 = vmatpush.msra.mxu0 0.0
        %950 = vmatpush.msra.mxu0 0.0
        %951 = vmatpush.msra.mxu0 0.0
        %952 = vmatpush.msra.mxu0 0.0
        %953 = vmatpush.msra.mxu0 0.0
        %954 = vmatpush.msra.mxu0 %v561
        %955 = vmatpush.msra.mxu0 %v560
        %956 = vmatpush.msra.mxu0 %v559
        %957 = vmatpush.msra.mxu0 %v558
        %958 = vmatmul.f32.gmra.mxu0 %v940
        %v959 = vpop.f32.mrf.mxu0
        %v960 = vadd.f32 0.0, %v959
        %961 = vdwg.mxu0
        %v962 = vadd.f32 %v937, %v960
        %v963 = vxor.u32 %v962, 2147483648
        %v964 = vmul.f32 %v963, 1.442695
        %v965 = vpow.pop %v964
        %v966 = vadd.f32 %v965, 1.0
        %v967 = vrcp.pop %v966
        %v968 = vmul.f32 %v966, %v967
        %v969 = vsub.f32 1.0, %v968
        %v970 = vmul.f32 %v967, %v969
        %v971 = vadd.f32 %v967, %v970
        %vm972 = vweird.f32 %v966
        %vm973 = vweird.f32 %v967
        %vm974 = vmor %vm972, %vm973
        %v975 = vsel %vm974, %v967, %v971
        %v976 = vand.u32 2147483647, %v966
        %vm977 = vcmp.eq.f32.partialorder %v976, 8.507059e+37
        %v978 = vand.u32 %v966, 2147483648
        %v979 = vor.u32 1.1754944e-38, %v978
        %v980 = vsel %vm977, %v979, %v975
        %v981 = vmul.f32 1.0, %v980
        %v982 = vtanh.pop %v962
        %v983 = vld [vmem:[#allocation5] sm:$0x3]
        %985 = vrot.lane.b32.xlu0 %v983, 32
        %v986 = vpop.permute.xlu0 %985
        %v988 = vmul.f32 %v981, %v986
        %990 = vrot.lane.b32.xlu0 %v982, 64
        %v991 = vpop.permute.xlu0 %990
        %v993 = vmul.f32 %v981, %v991
        %995 = vrot.lane.b32.xlu0 %v993, 32
        %v996 = vpop.permute.xlu0 %995
        %v998 = vadd.f32 %v988, %v996
        %v999 = vtanh.pop %v998
        %1001 = vrot.lane.b32.xlu0 %v999, 64
        %v1002 = vpop.permute.xlu0 %1001
        %v1004 = vmul.f32 %v981, %v1002
        %1006 = vrot.lane.b32.xlu0 %v998, 96
        %v1007 = vpop.permute.xlu0 %1006
        %1009 = vst.msk [vmem:[#allocation5] sm:$0x3] %vm681, %v1007
        %1011 = vrot.lane.b32.xlu0 %v1004, 32
        %v1012 = vpop.permute.xlu0 %1011
        %1014 = vst.msk [vmem:[#allocation4] sm:$0x3] %vm681, %v1012
        %s1015 = sadd.s32 %s563, 8
        %s1016 = scalar_lea.vmem [#allocation2], %s1015
        %1017 = vst.msk [vmem:[%s1016] sm:$0x3] %vm681, %v1012
        %s1018 = scalar_lea.vmem [#allocation3], 10
        %v1019 = vld [vmem:[%s1018] sm:$0x3]
        %v1020 = vld [vmem:[#allocation4] sm:$0x3]
        %v1022 = vsel %vm577, %v1020, 0
        %1024 = vmatpush.msra.mxu0 0.0
        %1025 = vmatpush.msra.mxu0 0.0
        %1026 = vmatpush.msra.mxu0 0.0
        %1027 = vmatpush.msra.mxu0 0.0
        %1028 = vmatpush.msra.mxu0 0.0
        %1029 = vmatpush.msra.mxu0 0.0
        %1030 = vmatpush.msra.mxu0 0.0
        %1031 = vmatpush.msra.mxu0 0.0
        %1032 = vmatpush.msra.mxu0 0.0
        %1033 = vmatpush.msra.mxu0 0.0
        %1034 = vmatpush.msra.mxu0 0.0
        %1035 = vmatpush.msra.mxu0 0.0
        %1036 = vmatpush.msra.mxu0 %v561
        %1037 = vmatpush.msra.mxu0 %v560
        %1038 = vmatpush.msra.mxu0 %v559
        %1039 = vmatpush.msra.mxu0 %v558
        %1040 = vmatmul.f32.gmra.mxu0 %v1022
        %v1041 = vpop.f32.mrf.mxu0
        %v1042 = vadd.f32 0.0, %v1041
        %1043 = vdwg.mxu0
        %v1044 = vadd.f32 %v1019, %v1042
        %v1045 = vxor.u32 %v1044, 2147483648
        %v1046 = vmul.f32 %v1045, 1.442695
        %v1047 = vpow.pop %v1046
        %v1048 = vadd.f32 %v1047, 1.0
        %v1049 = vrcp.pop %v1048
        %v1050 = vmul.f32 %v1048, %v1049
        %v1051 = vsub.f32 1.0, %v1050
        %v1052 = vmul.f32 %v1049, %v1051
        %v1053 = vadd.f32 %v1049, %v1052
        %vm1054 = vweird.f32 %v1048
        %vm1055 = vweird.f32 %v1049
        %vm1056 = vmor %vm1054, %vm1055
        %v1057 = vsel %vm1056, %v1049, %v1053
        %v1058 = vand.u32 2147483647, %v1048
        %vm1059 = vcmp.eq.f32.partialorder %v1058, 8.507059e+37
        %v1060 = vand.u32 %v1048, 2147483648
        %v1061 = vor.u32 1.1754944e-38, %v1060
        %v1062 = vsel %vm1059, %v1061, %v1057
        %v1063 = vmul.f32 1.0, %v1062
        %v1064 = vtanh.pop %v1044
        %v1065 = vld [vmem:[#allocation5] sm:$0x3]
        %1067 = vrot.lane.b32.xlu0 %v1065, 32
        %v1068 = vpop.permute.xlu0 %1067
        %v1070 = vmul.f32 %v1063, %v1068
        %1072 = vrot.lane.b32.xlu0 %v1064, 64
        %v1073 = vpop.permute.xlu0 %1072
        %v1075 = vmul.f32 %v1063, %v1073
        %1077 = vrot.lane.b32.xlu0 %v1075, 32
        %v1078 = vpop.permute.xlu0 %1077
        %v1080 = vadd.f32 %v1070, %v1078
        %v1081 = vtanh.pop %v1080
        %1083 = vrot.lane.b32.xlu0 %v1081, 64
        %v1084 = vpop.permute.xlu0 %1083
        %v1086 = vmul.f32 %v1063, %v1084
        %1088 = vrot.lane.b32.xlu0 %v1080, 96
        %v1089 = vpop.permute.xlu0 %1088
        %1091 = vst.msk [vmem:[#allocation5] sm:$0x3] %vm681, %v1089
        %1093 = vrot.lane.b32.xlu0 %v1086, 32
        %v1094 = vpop.permute.xlu0 %1093
        %1096 = vst.msk [vmem:[#allocation4] sm:$0x3] %vm681, %v1094
        %s1097 = sadd.s32 %s563, 10
        %s1098 = scalar_lea.vmem [#allocation2], %s1097
        %1099 = vst.msk [vmem:[%s1098] sm:$0x3] %vm681, %v1094
        %s1100 = scalar_lea.vmem [#allocation3], 12
        %v1101 = vld [vmem:[%s1100] sm:$0x3]
        %v1102 = vld [vmem:[#allocation4] sm:$0x3]
        %v1104 = vsel %vm577, %v1102, 0
        %1106 = vmatpush.msra.mxu0 0.0
        %1107 = vmatpush.msra.mxu0 0.0
        %1108 = vmatpush.msra.mxu0 0.0
        %1109 = vmatpush.msra.mxu0 0.0
        %1110 = vmatpush.msra.mxu0 0.0
        %1111 = vmatpush.msra.mxu0 0.0
        %1112 = vmatpush.msra.mxu0 0.0
        %1113 = vmatpush.msra.mxu0 0.0
        %1114 = vmatpush.msra.mxu0 0.0
        %1115 = vmatpush.msra.mxu0 0.0
        %1116 = vmatpush.msra.mxu0 0.0
        %1117 = vmatpush.msra.mxu0 0.0
        %1118 = vmatpush.msra.mxu0 %v561
        %1119 = vmatpush.msra.mxu0 %v560
        %1120 = vmatpush.msra.mxu0 %v559
        %1121 = vmatpush.msra.mxu0 %v558
        %1122 = vmatmul.f32.gmra.mxu0 %v1104
        %v1123 = vpop.f32.mrf.mxu0
        %v1124 = vadd.f32 0.0, %v1123
        %1125 = vdwg.mxu0
        %v1126 = vadd.f32 %v1101, %v1124
        %v1127 = vxor.u32 %v1126, 2147483648
        %v1128 = vmul.f32 %v1127, 1.442695
        %v1129 = vpow.pop %v1128
        %v1130 = vadd.f32 %v1129, 1.0
        %v1131 = vrcp.pop %v1130
        %v1132 = vmul.f32 %v1130, %v1131
        %v1133 = vsub.f32 1.0, %v1132
        %v1134 = vmul.f32 %v1131, %v1133
        %v1135 = vadd.f32 %v1131, %v1134
        %vm1136 = vweird.f32 %v1130
        %vm1137 = vweird.f32 %v1131
        %vm1138 = vmor %vm1136, %vm1137
        %v1139 = vsel %vm1138, %v1131, %v1135
        %v1140 = vand.u32 2147483647, %v1130
        %vm1141 = vcmp.eq.f32.partialorder %v1140, 8.507059e+37
        %v1142 = vand.u32 %v1130, 2147483648
        %v1143 = vor.u32 1.1754944e-38, %v1142
        %v1144 = vsel %vm1141, %v1143, %v1139
        %v1145 = vmul.f32 1.0, %v1144
        %v1146 = vtanh.pop %v1126
        %v1147 = vld [vmem:[#allocation5] sm:$0x3]
        %1149 = vrot.lane.b32.xlu0 %v1147, 32
        %v1150 = vpop.permute.xlu0 %1149
        %v1152 = vmul.f32 %v1145, %v1150
        %1154 = vrot.lane.b32.xlu0 %v1146, 64
        %v1155 = vpop.permute.xlu0 %1154
        %v1157 = vmul.f32 %v1145, %v1155
        %1159 = vrot.lane.b32.xlu0 %v1157, 32
        %v1160 = vpop.permute.xlu0 %1159
        %v1162 = vadd.f32 %v1152, %v1160
        %v1163 = vtanh.pop %v1162
        %1165 = vrot.lane.b32.xlu0 %v1163, 64
        %v1166 = vpop.permute.xlu0 %1165
        %v1168 = vmul.f32 %v1145, %v1166
        %1170 = vrot.lane.b32.xlu0 %v1162, 96
        %v1171 = vpop.permute.xlu0 %1170
        %1173 = vst.msk [vmem:[#allocation5] sm:$0x3] %vm681, %v1171
        %1175 = vrot.lane.b32.xlu0 %v1168, 32
        %v1176 = vpop.permute.xlu0 %1175
        %1178 = vst.msk [vmem:[#allocation4] sm:$0x3] %vm681, %v1176
        %s1179 = sadd.s32 %s563, 12
        %s1180 = scalar_lea.vmem [#allocation2], %s1179
        %1181 = vst.msk [vmem:[%s1180] sm:$0x3] %vm681, %v1176
        %s1182 = scalar_lea.vmem [#allocation3], 14
        %v1183 = vld [vmem:[%s1182] sm:$0x3]
        %v1184 = vld [vmem:[#allocation4] sm:$0x3]
        %v1186 = vsel %vm577, %v1184, 0
        %1188 = vmatpush.msra.mxu0 0.0
        %1189 = vmatpush.msra.mxu0 0.0
        %1190 = vmatpush.msra.mxu0 0.0
        %1191 = vmatpush.msra.mxu0 0.0
        %1192 = vmatpush.msra.mxu0 0.0
        %1193 = vmatpush.msra.mxu0 0.0
        %1194 = vmatpush.msra.mxu0 0.0
        %1195 = vmatpush.msra.mxu0 0.0
        %1196 = vmatpush.msra.mxu0 0.0
        %1197 = vmatpush.msra.mxu0 0.0
        %1198 = vmatpush.msra.mxu0 0.0
        %1199 = vmatpush.msra.mxu0 0.0
        %1200 = vmatpush.msra.mxu0 %v561
        %1201 = vmatpush.msra.mxu0 %v560
        %1202 = vmatpush.msra.mxu0 %v559
        %1203 = vmatpush.msra.mxu0 %v558
        %1204 = vmatmul.f32.gmra.mxu0 %v1186
        %v1205 = vpop.f32.mrf.mxu0
        %v1206 = vadd.f32 0.0, %v1205
        %1207 = vdwg.mxu0
        %v1208 = vadd.f32 %v1183, %v1206
        %v1209 = vxor.u32 %v1208, 2147483648
        %v1210 = vmul.f32 %v1209, 1.442695
        %v1211 = vpow.pop %v1210
        %v1212 = vadd.f32 %v1211, 1.0
        %v1213 = vrcp.pop %v1212
        %v1214 = vmul.f32 %v1212, %v1213
        %v1215 = vsub.f32 1.0, %v1214
        %v1216 = vmul.f32 %v1213, %v1215
        %v1217 = vadd.f32 %v1213, %v1216
        %vm1218 = vweird.f32 %v1212
        %vm1219 = vweird.f32 %v1213
        %vm1220 = vmor %vm1218, %vm1219
        %v1221 = vsel %vm1220, %v1213, %v1217
        %v1222 = vand.u32 2147483647, %v1212
        %vm1223 = vcmp.eq.f32.partialorder %v1222, 8.507059e+37
        %v1224 = vand.u32 %v1212, 2147483648
        %v1225 = vor.u32 1.1754944e-38, %v1224
        %v1226 = vsel %vm1223, %v1225, %v1221
        %v1227 = vmul.f32 1.0, %v1226
        %v1228 = vtanh.pop %v1208
        %v1229 = vld [vmem:[#allocation5] sm:$0x3]
        %1231 = vrot.lane.b32.xlu0 %v1229, 32
        %v1232 = vpop.permute.xlu0 %1231
        %v1234 = vmul.f32 %v1227, %v1232
        %1236 = vrot.lane.b32.xlu0 %v1228, 64
        %v1237 = vpop.permute.xlu0 %1236
        %v1239 = vmul.f32 %v1227, %v1237
        %1241 = vrot.lane.b32.xlu0 %v1239, 32
        %v1242 = vpop.permute.xlu0 %1241
        %v1244 = vadd.f32 %v1234, %v1242
        %v1245 = vtanh.pop %v1244
        %1247 = vrot.lane.b32.xlu0 %v1245, 64
        %v1248 = vpop.permute.xlu0 %1247
        %v1250 = vmul.f32 %v1227, %v1248
        %1252 = vrot.lane.b32.xlu0 %v1244, 96
        %v1253 = vpop.permute.xlu0 %1252
        %1255 = vst.msk [vmem:[#allocation5] sm:$0x3] %vm681, %v1253
        %1257 = vrot.lane.b32.xlu0 %v1250, 32
        %v1258 = vpop.permute.xlu0 %1257
        %1260 = vst.msk [vmem:[#allocation4] sm:$0x3] %vm681, %v1258
        %s1261 = sadd.s32 %s563, 14
        %s1262 = scalar_lea.vmem [#allocation2], %s1261
        %1263 = vst.msk [vmem:[%s1262] sm:$0x3] %vm681, %v1258
        %v1264 = vld [vmem:[%s566] sm:$0xff]
        %v1265 = vld [vmem:[%s566 + $0x8] sm:$0xff]
        %1266 = vst.msk [vmem:[#allocation15] sm:$0xff] %vm577, %v1264
        %1267 = vst.msk [vmem:[#allocation15 + $0x8] sm:$0xff] %vm577, %v1265
        // Predicated region
        $region73: #{tpu_custom_call.1} parent=43 // pred_check
          %p1268 = pneg %p538
        $region74: #{tpu_custom_call.1} parent=43 // pred_check_branch
          %1270 = sbr.rel (%p1268) target = $region76
        $region75: #{tpu_custom_call.1} parent=43 // pred_region
          %v1271 = vld [vmem:[#allocation4] sm:$0x3]
          %1272 = vst.msk [vmem:[%s520] sm:$0x3] %vm681, %v1271
          %v1273 = vld [vmem:[#allocation5] sm:$0x3]
          %1274 = vst.msk [vmem:[%s527] sm:$0x3] %vm681, %v1273
        $region76: #{tpu_custom_call.1} parent=43 // pred_fallthru
          _
        %s1275 = sand.u32 %s33, 1
        %s1276 = scalar_lea.sflag [#allocation17], %s1275
        %s1277 = sand.u32 %s243, 1
        %s1278 = smul.addr %s1277, 2
        %s1279 = scalar_lea.vmem [#allocation16], %s1278
        %s1280 = sand.u32 %s33, 1
        %s1281 = scalar_lea.sflag [#allocation17], %s1280
        %s1282 = sand.u32 %s269, 1
        %s1283 = smul.addr %s1282, 2
        %s1284 = scalar_lea.vmem [#allocation18], %s1283
        // Predicated region
        $region77: #{tpu_custom_call.1} parent=43 // pred_check
          %p1285 = pneg %p227
        $region78: #{tpu_custom_call.1} parent=43 // pred_check_branch
          %1287 = sbr.rel (%p1285) target = $region80
        $region79: #{tpu_custom_call.1} parent=43 // pred_region
          %s1288 = smul.u32 2, %s38
          %1290 = vsyncadd [#allocation8], 0
          %s1291 = smul.addr %s1288, 8
          %s1292 = scalar_lea.hbm %s6, %s1291
          %s1293 = sshll.u32 [#allocation15], 4
          %s1294 = int_to_ptr.vmem [resolvable:$true] %s1293
          %s1295 = sshll.u32 %s1292, 4
          %s1296 = int_to_ptr.hbm [resolvable:$true] %s1295
          %1301 = dma.vmem_to_hbm [thread:$0]  %s1294, 256, %s1296, [#allocation8], 128, 128, 8
        $region80: #{tpu_custom_call.1} parent=43 // pred_fallthru
          _
        // Predicated region
        $region81: #{tpu_custom_call.1} parent=43 // pred_check
          %p1302 = pneg %p253
        $region82: #{tpu_custom_call.1} parent=43 // pred_check_branch
          %1304 = sbr.rel (%p1302) target = $region84
        $region83: #{tpu_custom_call.1} parent=43 // pred_region
          %1306 = vsyncadd %s1276, 0
          %s1307 = smul.addr %s37, 2
          %s1308 = scalar_lea.hbm %s7, %s1307
          %s1310 = sshll.u32 %s1279, 4
          %s1311 = int_to_ptr.vmem [resolvable:$true] %s1310
          %s1312 = sshll.u32 %s1308, 4
          %s1313 = int_to_ptr.hbm [resolvable:$true] %s1312
          %1315 = dma.vmem_to_hbm [thread:$0]  %s1311, 32, %s1313, %s1276
        $region84: #{tpu_custom_call.1} parent=43 // pred_fallthru
          _
        // Predicated region
        $region85: #{tpu_custom_call.1} parent=43 // pred_check
          %p1316 = pneg %p279
        $region86: #{tpu_custom_call.1} parent=43 // pred_check_branch
          %1318 = sbr.rel (%p1316) target = $region88
        $region87: #{tpu_custom_call.1} parent=43 // pred_region
          %1320 = vsyncadd %s1281, 0
          %s1321 = smul.addr %s37, 2
          %s1322 = scalar_lea.hbm %s8, %s1321
          %s1324 = sshll.u32 %s1284, 4
          %s1325 = int_to_ptr.vmem [resolvable:$true] %s1324
          %s1326 = sshll.u32 %s1322, 4
          %s1327 = int_to_ptr.hbm [resolvable:$true] %s1326
          %1329 = dma.vmem_to_hbm [thread:$0]  %s1325, 32, %s1327, %s1281
        $region88: #{tpu_custom_call.1} parent=43 // pred_fallthru
          _
        // Predicated region
        $region89: #{tpu_custom_call.1} parent=43 // pred_check
          %p1330 = pneg %p227
        $region90: #{tpu_custom_call.1} parent=43 // pred_check_branch
          %1332 = sbr.rel (%p1330) target = $region92
        $region91: #{tpu_custom_call.1} parent=43 // pred_region
          %1334 = dma.done [#allocation8], 256
        $region92: #{tpu_custom_call.1} parent=43 // pred_fallthru
          _
      $region44: #{tpu_custom_call.1} parent=5 // pred_fallthru
        _
      %p1335 = scmp.le.s32.totalorder 2, %s28
      // Predicated region
      $region93: #{tpu_custom_call.1} parent=5 // pred_check
        %p1336 = pneg %p1335
      $region94: #{tpu_custom_call.1} parent=5 // pred_check_branch
        %1338 = sbr.rel (%p1336) target = $region96
      $region95: #{tpu_custom_call.1} parent=5 // pred_region
        %s1339 = ssub.s32 %s28, 2
        // Predicated region
        $region97: #{tpu_custom_call.1} parent=95 // pred_check
          %p1340 = pneg %p259
        $region98: #{tpu_custom_call.1} parent=95 // pred_check_branch
          %1342 = sbr.rel (%p1340) target = $region100
        $region99: #{tpu_custom_call.1} parent=95 // pred_region
          %s1343 = sand.u32 %s34, 1
          %s1344 = scalar_lea.sflag [#allocation17], %s1343
          %s1345 = sand.u32 %s244, 1
          %s1346 = smul.addr %s1345, 2
          %s1347 = scalar_lea.vmem [#allocation16], %s1346
          %1349 = dma.done %s1344, 32
        $region100: #{tpu_custom_call.1} parent=95 // pred_fallthru
          _
        // Predicated region
        $region101: #{tpu_custom_call.1} parent=95 // pred_check
          %p1350 = pneg %p285
        $region102: #{tpu_custom_call.1} parent=95 // pred_check_branch
          %1352 = sbr.rel (%p1350) target = $region104
        $region103: #{tpu_custom_call.1} parent=95 // pred_region
          %s1353 = sand.u32 %s34, 1
          %s1354 = scalar_lea.sflag [#allocation17], %s1353
          %s1355 = sand.u32 %s270, 1
          %s1356 = smul.addr %s1355, 2
          %s1357 = scalar_lea.vmem [#allocation18], %s1356
          %1359 = dma.done %s1354, 32
        $region104: #{tpu_custom_call.1} parent=95 // pred_fallthru
          _
      $region96: #{tpu_custom_call.1} parent=5 // pred_fallthru
        _
    $region6: #{tpu_custom_call.1} parent=1 // loop_footer
      %s32 = sadd.s32 1, %s28
    $region7: #{tpu_custom_call.1} parent=1 // loop_footer_branch
      %27 = sbr.rel target = $region3
    $region8: #{tpu_custom_call.1} parent=1 // loop_exit
      _
    %1360 = vsyncpa [#allocation7], 1
    %s1361 = scalar_lea.sflag [#allocation7], 1
    %1362 = vsyncpa %s1361, 1
    %1363 = vsyncpa [#allocation10], 1
    %s1364 = scalar_lea.sflag [#allocation10], 1
    %1365 = vsyncpa %s1364, 1
    %1366 = vsyncpa [#allocation13], 1
    %s1367 = scalar_lea.sflag [#allocation13], 1
    %1368 = vsyncpa %s1367, 1
    %1369 = vsyncpa [#allocation8], 1
    %s1370 = scalar_lea.sflag [#allocation8], 1
    %1371 = vsyncpa %s1370, 1
    %1372 = vsyncpa [#allocation17], 1
    %s1373 = scalar_lea.sflag [#allocation17], 1
    %1374 = vsyncpa %s1373, 1

</llo_original>
